<compile_context>
chip_gen: v7x
topology: tpu7x:2x2x1
jax: 0.10.0
libtpu: 0.0.40
codegen_flags: <defaults>
</compile_context>

<pallas_src>
import functools

import numpy as np
import jax
import jax.numpy as jnp
from jax import lax
from jax.experimental import pallas as pl
from jax.experimental.pallas import tpu as pltpu


def _round_up(v, m):
    return ((v + m - 1) // m) * m


def _pad_ch(c):
    """Lane-dense effective channel width (multiple of 128)."""
    return max(128, _round_up(c, 128))


# -----------------------------------------------------------------------------
# Pallas kernel: 3x3 dilated conv as 9 shifted-row matmuls + bias (+ReLU).
#   x_ref  : (m_in,  Cin)   bf16  flattened zero-padded activation rows
#   w_ref  : (9, Cin, tco)  bf16  per-tap weight slices
#   b_ref  : (1,  tco)      f32   bias
#   o_ref  : (m_out, tco)   bf16  output rows (padded-plane layout)
#   acc_ref: (m_out, tco)   f32   accumulator scratch
# -----------------------------------------------------------------------------
def _conv3x3_kernel(x_ref, w_ref, b_ref, o_ref, acc_ref, *, relu, m_out, offs):
    for t, off in enumerate(offs):                   # 9 static tap offsets
        contrib = jnp.dot(x_ref[pl.ds(off, m_out), :], w_ref[t],
                          preferred_element_type=jnp.float32)
        if t == 0:
            acc_ref[...] = contrib
        else:
            acc_ref[...] += contrib
    out = acc_ref[...] + b_ref[...]
    if relu:
        out = jnp.maximum(out, 0.0)
    o_ref[...] = out.astype(o_ref.dtype)


def conv3x3(x, w, b, *, dil, relu):
    """NHWC 3x3 dilated 'same' conv (padding=dil) + bias (+ReLU) via Pallas.

    x : (N, H, W, C)   bf16, C lane-dense (pad channels are zeros)
    w : (9, C, Cout_p) bf16 per-tap weights (pad rows/cols are zeros)
    b : (1, Cout_p)    f32
    returns (N, H, W, Cout_p) bf16.
    """
    N, H, W, C = x.shape
    assert w.shape[0] == 9 and w.shape[1] == C, (w.shape, x.shape)
    cout_p = w.shape[2]
    d = dil
    Hp, Wp = H + 2 * d, W + 2 * d
    S = Hp * Wp                                  # rows per padded image plane

    # Outputs are computed for the whole padded plane (garbage rows/columns
    # are sliced off below); this keeps every tap a contiguous row window.
    m_out = _round_up(N * S, 16)                 # bf16 sublane packing
    maxoff = 2 * d * Wp + 2 * d
    m_in = _round_up(m_out + maxoff, 8)

    xp = jnp.pad(x, ((0, 0), (d, d), (d, d), (0, 0)))         # zero halo
    xf = jnp.pad(xp.reshape(N * S, C), ((0, m_in - N * S), (0, 0)))

    tco = 256 if cout_p % 256 == 0 else cout_p   # 128 for the 64-ch layers
    n_co = cout_p // tco
    offs = tuple(ky * d * Wp + kx * d for ky in range(3) for kx in range(3))

    cost = pl.CostEstimate(
        flops=2 * 9 * m_out * C * cout_p,
        transcendentals=0,
        bytes_accessed=(xf.size * 2 + w.size * 2 + b.size * 4
                        + m_out * cout_p * 2),
    )

    out = pl.pallas_call(
        functools.partial(_conv3x3_kernel, relu=relu, m_out=m_out, offs=offs),
        out_shape=jax.ShapeDtypeStruct((m_out, cout_p), jnp.bfloat16),
        grid_spec=pltpu.PrefetchScalarGridSpec(
            num_scalar_prefetch=0,
            grid=(n_co,),
            in_specs=[
                pl.BlockSpec((m_in, C), lambda co: (0, 0)),
                pl.BlockSpec((9, C, tco), lambda co: (0, 0, co)),
                pl.BlockSpec((1, tco), lambda co: (0, co)),
            ],
            out_specs=pl.BlockSpec((m_out, tco), lambda co: (0, co)),
            scratch_shapes=[pltpu.VMEM((m_out, tco), jnp.float32)],
        ),
        compiler_params=pltpu.CompilerParams(
            dimension_semantics=("parallel",)),
        cost_estimate=cost,
    )(xf, w, b)

    # Drop the garbage rows/columns of the padded-plane layout.
    return out[:N * S].reshape(N, Hp, Wp, cout_p)[:, :H, :W, :]


def _conv3x3_reference(x, w, b, *, dil, relu):
    """Pure-XLA reference (same bf16 inputs, f32 math) for a sanity check."""
    wf = w.reshape(3, 3, w.shape[1], w.shape[2]).astype(jnp.float32)
    y = lax.conv_general_dilated(
        x.astype(jnp.float32), wf, window_strides=(1, 1),
        padding=((dil, dil), (dil, dil)), rhs_dilation=(dil, dil),
        dimension_numbers=("NHWC", "HWIO", "NHWC"))
    y = y + b.reshape(1, 1, 1, -1)
    return jnp.maximum(y, 0.0) if relu else y


# -----------------------------------------------------------------------------
# Haar DWT / IWT (matches common.DWT / common.IWT, NHWC layout, bf16 glue)
# TODO(synk): pure data re-arrangement kept in XLA, not fused into kernels.
# -----------------------------------------------------------------------------
def dwt(x):
    """(N,H,W,C) -> (N,H/2,W/2,4C), channel order [LL, HL, LH, HH]."""
    x01 = x[:, 0::2, :, :] / 2
    x02 = x[:, 1::2, :, :] / 2
    x1 = x01[:, :, 0::2, :]
    x2 = x02[:, :, 0::2, :]
    x3 = x01[:, :, 1::2, :]
    x4 = x02[:, :, 1::2, :]
    ll = x1 + x2 + x3 + x4
    hl = -x1 - x2 + x3 + x4
    lh = -x1 + x2 - x3 + x4
    hh = x1 - x2 - x3 + x4
    return jnp.concatenate([ll, hl, lh, hh], axis=-1)


def iwt(x):
    """(N,H,W,4C) -> (N,2H,2W,C), inverse of dwt()."""
    N, H, W, C = x.shape
    co = C // 4
    x1 = x[..., 0 * co:1 * co] / 2
    x2 = x[..., 1 * co:2 * co] / 2
    x3 = x[..., 2 * co:3 * co] / 2
    x4 = x[..., 3 * co:4 * co] / 2
    a = x1 - x2 - x3 + x4   # (even h, even w)
    b = x1 - x2 + x3 - x4   # (odd  h, even w)
    c = x1 + x2 - x3 - x4   # (even h, odd  w)
    d = x1 + x2 + x3 + x4   # (odd  h, odd  w)
    top = jnp.stack([a, c], axis=3).reshape(N, H, 2 * W, co)
    bot = jnp.stack([b, d], axis=3).reshape(N, H, 2 * W, co)
    return jnp.stack([top, bot], axis=2).reshape(N, 2 * H, 2 * W, co)


# -----------------------------------------------------------------------------
# MWCNN layer table: (cin, cin_eff, cout, cout_eff, dilation, relu) per conv
# -----------------------------------------------------------------------------
def _chain(layers):
    specs, prev_eff = [], None
    for i, (ci, co, dil, relu) in enumerate(layers):
        ci_eff = _pad_ch(ci) if i == 0 else prev_eff     # carry padded widths
        co_eff = _pad_ch(co)
        specs.append((ci, ci_eff, co, co_eff, dil, relu))
        prev_eff = co_eff
    return tuple(specs)


def _layer_specs(n_feats=64, n_color=1):
    f = n_feats
    bblock = lambda ci, co: [(ci, co, 1, True)]                    # BBlock
    dblock_com1 = lambda c: [(c, c, 2, True), (c, c, 1, True)]     # DBlock_com1
    dblock_inv1 = lambda c: [(c, c, 2, True), (c, c, 1, True)]     # DBlock_inv1
    dblock_com = lambda c: [(c, c, 2, True), (c, c, 3, True)]      # DBlock_com
    dblock_inv = lambda c: [(c, c, 3, True), (c, c, 2, True)]      # DBlock_inv
    return {
        "head":   _chain(bblock(n_color, f)),
        "d_l0":   _chain(dblock_com1(f)),
        "d_l1":   _chain(bblock(4 * f, 2 * f) + dblock_com1(2 * f)),
        "d_l2":   _chain(bblock(8 * f, 4 * f) + dblock_com1(4 * f)),
        "pro_l3": _chain(bblock(16 * f, 8 * f) + dblock_com(8 * f)
                         + dblock_inv(8 * f) + bblock(8 * f, 16 * f)),
        "i_l2":   _chain(dblock_inv1(4 * f) + bblock(4 * f, 8 * f)),
        "i_l1":   _chain(dblock_inv1(2 * f) + bblock(2 * f, 4 * f)),
        "i_l0":   _chain(dblock_inv1(f)),
        "tail":   _chain([(f, n_color, 1, False)]),                # default_conv
    }


LAYER_SPECS = _layer_specs(n_feats=64, n_color=1)


def init_params(key, specs):
    """PyTorch-style uniform(+-1/sqrt(fan_in)) init, pre-packed for the kernel:
    per-tap bf16 weights (9, Cin_eff, Cout_eff) and f32 bias (1, Cout_eff),
    with pad rows/cols explicitly zero so carried pad channels stay zero."""
    params = {}
    for name, layers in specs.items():
        plist = []
        for (ci, ci_eff, co, co_eff, dil, relu) in layers:
            key, kw, kb = jax.random.split(key, 3)
            bound = 1.0 / np.sqrt(9 * ci)
            wr = jax.random.uniform(kw, (3, 3, ci, co), jnp.float32, -bound, bound)
            br = jax.random.uniform(kb, (co,), jnp.float32, -bound, bound)
            w = jnp.zeros((9, ci_eff, co_eff), jnp.bfloat16)
            w = w.at[:, :ci, :co].set(wr.reshape(9, ci, co).astype(jnp.bfloat16))
            b = jnp.zeros((1, co_eff), jnp.float32).at[0, :co].set(br)
            plist.append((w, b))
        params[name] = plist
    return params


def _run_seq(x, wbs, layers):
    for (w, b), (_ci, _ci_eff, _co, _co_eff, dil, relu) in zip(wbs, layers):
        x = conv3x3(x, w, b, dil=dil, relu=relu)
    return x


def _pad_channels(x, c):
    pad = c - x.shape[-1]
    return x if pad == 0 else jnp.pad(x, ((0, 0), (0, 0), (0, 0), (0, pad)))


def mwcnn_forward(x_nchw, params):
    """MWCNN.forward — input/output NCHW (PyTorch convention)."""
    specs = LAYER_SPECS
    x = jnp.transpose(x_nchw, (0, 2, 3, 1)).astype(jnp.bfloat16)   # -> NHWC bf16
    x = _pad_channels(x, specs["head"][0][1])

    h = _run_seq(x, params["head"], specs["head"])
    h = _run_seq(h, params["d_l0"], specs["d_l0"])
    x0 = h[..., :specs["d_l0"][-1][2]]            # real 64 channels

    x1 = _run_seq(dwt(x0), params["d_l1"], specs["d_l1"])
    x2 = _run_seq(dwt(x1), params["d_l2"], specs["d_l2"])

    x_ = iwt(_run_seq(dwt(x2), params["pro_l3"], specs["pro_l3"])) + x2
    x_ = iwt(_run_seq(x_, params["i_l2"], specs["i_l2"])) + x1
    x_ = iwt(_run_seq(x_, params["i_l1"], specs["i_l1"])) + x0

    x_ = _pad_channels(x_, specs["i_l0"][0][1])
    h = _run_seq(x_, params["i_l0"], specs["i_l0"])
    h = _run_seq(h, params["tail"], specs["tail"])
    out = h[..., :specs["tail"][-1][2]]           # nColor = 1
    return jnp.transpose(out, (0, 3, 1, 2)).astype(jnp.float32)    # -> NCHW


if __name__ == "__main__":
    # --- single-conv sanity check against an XLA reference ------------------
    kc = jax.random.PRNGKey(1)
    kx_, kw_, kb_ = jax.random.split(kc, 3)
    xt = jax.random.normal(kx_, (1, 8, 8, 128), jnp.float32).astype(jnp.bfloat16)
    wt = (jax.random.normal(kw_, (9, 128, 128), jnp.float32) * 0.05).astype(jnp.bfloat16)
    bt = jax.random.normal(kb_, (1, 128), jnp.float32) * 0.05
    got = conv3x3(xt, wt, bt, dil=2, relu=True).astype(jnp.float32)
    want = _conv3x3_reference(xt, wt, bt, dil=2, relu=True)
    err = float(jnp.max(jnp.abs(got - want)))
    assert jnp.allclose(got, want, atol=0.1, rtol=0.1), err

    # --- full MWCNN forward --------------------------------------------------
    key = jax.random.PRNGKey(0)
    k_x, k_p = jax.random.split(key)
    # nColor = 1 (as in MWCNN.__init__); spatial divisible by 8 (3 DWT levels).
    x = jax.random.normal(k_x, (2, 1, 16, 16), jnp.float32)
    params = init_params(k_p, LAYER_SPECS)

    fwd = jax.jit(mwcnn_forward)
    out = jax.block_until_ready(fwd(x, params))

    assert out.shape == (2, 1, 16, 16), out.shape
    assert bool(jnp.all(jnp.isfinite(out)))
    print("KERNEL_OK")
</pallas_src>

<mosaic_0001>
module attributes {stable_mosaic.version = 11 : i64} {
  func.func @_conv3x3_kernel(%arg0: i32, %arg1: memref<200x128xbf16, #tpu.memory_space<vmem>>, %arg2: memref<9x128x128xbf16, #tpu.memory_space<vmem>>, %arg3: memref<1x128xf32, #tpu.memory_space<vmem>>, %arg4: memref<144x128xbf16, #tpu.memory_space<vmem>>, %arg5: memref<144x128xf32, #tpu.memory_space<vmem>>) attributes {dimension_semantics = [#tpu.dimension_semantics<parallel>], iteration_bounds = array<i64: 1>, scalar_prefetch = 0 : i64, scratch_operands = 1 : i64, tpu.core_type = #tpu.core_type<tc>, window_params = [{pipeline_mode = #tpu.pipeline_mode<synchronous>, transform_indices = @transform_0, window_bounds = array<i64: 200, 128>}, {transform_indices = @transform_1, window_bounds = array<i64: 9, 128, 128>}, {transform_indices = @transform_2, window_bounds = array<i64: 1, 128>}, {transform_indices = @transform_3, window_bounds = array<i64: 144, 128>}]} {
    %c0 = arith.constant 0 : index
    %c0_0 = arith.constant 0 : index
    %0 = vector.load %arg1[%c0, %c0_0] : memref<200x128xbf16, #tpu.memory_space<vmem>>, vector<144x128xbf16>
    %c0_1 = arith.constant 0 : index
    %c0_2 = arith.constant 0 : index
    %c0_3 = arith.constant 0 : index
    %1 = vector.load %arg2[%c0_1, %c0_2, %c0_3] : memref<9x128x128xbf16, #tpu.memory_space<vmem>>, vector<1x128x128xbf16>
    %2 = vector.shape_cast %1 : vector<1x128x128xbf16> to vector<128x128xbf16>
    %cst = arith.constant dense<0.000000e+00> : vector<144x128xf32>
    %3 = tpu.matmul %0, %2, %cst {dimension_numbers = #tpu.dot_dimension_numbers<[1], [0], [0], [1], [0, 0, 1, 1], [], []>} : vector<144x128xbf16>, vector<128x128xbf16>, vector<144x128xf32> -> vector<144x128xf32>
    %c0_4 = arith.constant 0 : index
    %c0_5 = arith.constant 0 : index
    %4 = vector.load %arg5[%c0_4, %c0_5] : memref<144x128xf32, #tpu.memory_space<vmem>>, vector<144x128xf32>
    tpu.vector_store %arg5[%c0_4, %c0_5], %3 {strides = array<i32>} : memref<144x128xf32, #tpu.memory_space<vmem>>, vector<144x128xf32>,
    %c2 = arith.constant 2 : index
    %c0_6 = arith.constant 0 : index
    %5 = vector.load %arg1[%c2, %c0_6] : memref<200x128xbf16, #tpu.memory_space<vmem>>, vector<144x128xbf16>
    %c1 = arith.constant 1 : index
    %c0_7 = arith.constant 0 : index
    %c0_8 = arith.constant 0 : index
    %6 = vector.load %arg2[%c1, %c0_7, %c0_8] : memref<9x128x128xbf16, #tpu.memory_space<vmem>>, vector<1x128x128xbf16>
    %7 = vector.shape_cast %6 : vector<1x128x128xbf16> to vector<128x128xbf16>
    %cst_9 = arith.constant dense<0.000000e+00> : vector<144x128xf32>
    %8 = tpu.matmul %5, %7, %cst_9 {dimension_numbers = #tpu.dot_dimension_numbers<[1], [0], [0], [1], [0, 0, 1, 1], [], []>} : vector<144x128xbf16>, vector<128x128xbf16>, vector<144x128xf32> -> vector<144x128xf32>
    %c0_10 = arith.constant 0 : index
    %c0_11 = arith.constant 0 : index
    %9 = vector.load %arg5[%c0_10, %c0_11] : memref<144x128xf32, #tpu.memory_space<vmem>>, vector<144x128xf32>
    %10 = arith.addf %9, %8 : vector<144x128xf32>
    %c0_12 = arith.constant 0 : index
    %c0_13 = arith.constant 0 : index
    %11 = vector.load %arg5[%c0_12, %c0_13] : memref<144x128xf32, #tpu.memory_space<vmem>>, vector<144x128xf32>
    tpu.vector_store %arg5[%c0_12, %c0_13], %10 {strides = array<i32>} : memref<144x128xf32, #tpu.memory_space<vmem>>, vector<144x128xf32>,
    %c4 = arith.constant 4 : index
    %c0_14 = arith.constant 0 : index
    %12 = vector.load %arg1[%c4, %c0_14] : memref<200x128xbf16, #tpu.memory_space<vmem>>, vector<144x128xbf16>
    %c2_15 = arith.constant 2 : index
    %c0_16 = arith.constant 0 : index
    %c0_17 = arith.constant 0 : index
    %13 = vector.load %arg2[%c2_15, %c0_16, %c0_17] : memref<9x128x128xbf16, #tpu.memory_space<vmem>>, vector<1x128x128xbf16>
    %14 = vector.shape_cast %13 : vector<1x128x128xbf16> to vector<128x128xbf16>
    %cst_18 = arith.constant dense<0.000000e+00> : vector<144x128xf32>
    %15 = tpu.matmul %12, %14, %cst_18 {dimension_numbers = #tpu.dot_dimension_numbers<[1], [0], [0], [1], [0, 0, 1, 1], [], []>} : vector<144x128xbf16>, vector<128x128xbf16>, vector<144x128xf32> -> vector<144x128xf32>
    %c0_19 = arith.constant 0 : index
    %c0_20 = arith.constant 0 : index
    %16 = vector.load %arg5[%c0_19, %c0_20] : memref<144x128xf32, #tpu.memory_space<vmem>>, vector<144x128xf32>
    %17 = arith.addf %16, %15 : vector<144x128xf32>
    %c0_21 = arith.constant 0 : index
    %c0_22 = arith.constant 0 : index
    %18 = vector.load %arg5[%c0_21, %c0_22] : memref<144x128xf32, #tpu.memory_space<vmem>>, vector<144x128xf32>
    tpu.vector_store %arg5[%c0_21, %c0_22], %17 {strides = array<i32>} : memref<144x128xf32, #tpu.memory_space<vmem>>, vector<144x128xf32>,
    %c24 = arith.constant 24 : index
    %c0_23 = arith.constant 0 : index
    %19 = vector.load %arg1[%c24, %c0_23] : memref<200x128xbf16, #tpu.memory_space<vmem>>, vector<144x128xbf16>
    %c3 = arith.constant 3 : index
    %c0_24 = arith.constant 0 : index
    %c0_25 = arith.constant 0 : index
    %20 = vector.load %arg2[%c3, %c0_24, %c0_25] : memref<9x128x128xbf16, #tpu.memory_space<vmem>>, vector<1x128x128xbf16>
    %21 = vector.shape_cast %20 : vector<1x128x128xbf16> to vector<128x128xbf16>
    %cst_26 = arith.constant dense<0.000000e+00> : vector<144x128xf32>
    %22 = tpu.matmul %19, %21, %cst_26 {dimension_numbers = #tpu.dot_dimension_numbers<[1], [0], [0], [1], [0, 0, 1, 1], [], []>} : vector<144x128xbf16>, vector<128x128xbf16>, vector<144x128xf32> -> vector<144x128xf32>
    %c0_27 = arith.constant 0 : index
    %c0_28 = arith.constant 0 : index
    %23 = vector.load %arg5[%c0_27, %c0_28] : memref<144x128xf32, #tpu.memory_space<vmem>>, vector<144x128xf32>
    %24 = arith.addf %23, %22 : vector<144x128xf32>
    %c0_29 = arith.constant 0 : index
    %c0_30 = arith.constant 0 : index
    %25 = vector.load %arg5[%c0_29, %c0_30] : memref<144x128xf32, #tpu.memory_space<vmem>>, vector<144x128xf32>
    tpu.vector_store %arg5[%c0_29, %c0_30], %24 {strides = array<i32>} : memref<144x128xf32, #tpu.memory_space<vmem>>, vector<144x128xf32>,
    %c26 = arith.constant 26 : index
    %c0_31 = arith.constant 0 : index
    %26 = vector.load %arg1[%c26, %c0_31] : memref<200x128xbf16, #tpu.memory_space<vmem>>, vector<144x128xbf16>
    %c4_32 = arith.constant 4 : index
    %c0_33 = arith.constant 0 : index
    %c0_34 = arith.constant 0 : index
    %27 = vector.load %arg2[%c4_32, %c0_33, %c0_34] : memref<9x128x128xbf16, #tpu.memory_space<vmem>>, vector<1x128x128xbf16>
    %28 = vector.shape_cast %27 : vector<1x128x128xbf16> to vector<128x128xbf16>
    %cst_35 = arith.constant dense<0.000000e+00> : vector<144x128xf32>
    %29 = tpu.matmul %26, %28, %cst_35 {dimension_numbers = #tpu.dot_dimension_numbers<[1], [0], [0], [1], [0, 0, 1, 1], [], []>} : vector<144x128xbf16>, vector<128x128xbf16>, vector<144x128xf32> -> vector<144x128xf32>
    %c0_36 = arith.constant 0 : index
    %c0_37 = arith.constant 0 : index
    %30 = vector.load %arg5[%c0_36, %c0_37] : memref<144x128xf32, #tpu.memory_space<vmem>>, vector<144x128xf32>
    %31 = arith.addf %30, %29 : vector<144x128xf32>
    %c0_38 = arith.constant 0 : index
    %c0_39 = arith.constant 0 : index
    %32 = vector.load %arg5[%c0_38, %c0_39] : memref<144x128xf32, #tpu.memory_space<vmem>>, vector<144x128xf32>
    tpu.vector_store %arg5[%c0_38, %c0_39], %31 {strides = array<i32>} : memref<144x128xf32, #tpu.memory_space<vmem>>, vector<144x128xf32>,
    %c28 = arith.constant 28 : index
    %c0_40 = arith.constant 0 : index
    %33 = vector.load %arg1[%c28, %c0_40] : memref<200x128xbf16, #tpu.memory_space<vmem>>, vector<144x128xbf16>
    %c5 = arith.constant 5 : index
    %c0_41 = arith.constant 0 : index
    %c0_42 = arith.constant 0 : index
    %34 = vector.load %arg2[%c5, %c0_41, %c0_42] : memref<9x128x128xbf16, #tpu.memory_space<vmem>>, vector<1x128x128xbf16>
    %35 = vector.shape_cast %34 : vector<1x128x128xbf16> to vector<128x128xbf16>
    %cst_43 = arith.constant dense<0.000000e+00> : vector<144x128xf32>
    %36 = tpu.matmul %33, %35, %cst_43 {dimension_numbers = #tpu.dot_dimension_numbers<[1], [0], [0], [1], [0, 0, 1, 1], [], []>} : vector<144x128xbf16>, vector<128x128xbf16>, vector<144x128xf32> -> vector<144x128xf32>
    %c0_44 = arith.constant 0 : index
    %c0_45 = arith.constant 0 : index
    %37 = vector.load %arg5[%c0_44, %c0_45] : memref<144x128xf32, #tpu.memory_space<vmem>>, vector<144x128xf32>
    %38 = arith.addf %37, %36 : vector<144x128xf32>
    %c0_46 = arith.constant 0 : index
    %c0_47 = arith.constant 0 : index
    %39 = vector.load %arg5[%c0_46, %c0_47] : memref<144x128xf32, #tpu.memory_space<vmem>>, vector<144x128xf32>
    tpu.vector_store %arg5[%c0_46, %c0_47], %38 {strides = array<i32>} : memref<144x128xf32, #tpu.memory_space<vmem>>, vector<144x128xf32>,
    %c48 = arith.constant 48 : index
    %c0_48 = arith.constant 0 : index
    %40 = vector.load %arg1[%c48, %c0_48] : memref<200x128xbf16, #tpu.memory_space<vmem>>, vector<144x128xbf16>
    %c6 = arith.constant 6 : index
    %c0_49 = arith.constant 0 : index
    %c0_50 = arith.constant 0 : index
    %41 = vector.load %arg2[%c6, %c0_49, %c0_50] : memref<9x128x128xbf16, #tpu.memory_space<vmem>>, vector<1x128x128xbf16>
    %42 = vector.shape_cast %41 : vector<1x128x128xbf16> to vector<128x128xbf16>
    %cst_51 = arith.constant dense<0.000000e+00> : vector<144x128xf32>
    %43 = tpu.matmul %40, %42, %cst_51 {dimension_numbers = #tpu.dot_dimension_numbers<[1], [0], [0], [1], [0, 0, 1, 1], [], []>} : vector<144x128xbf16>, vector<128x128xbf16>, vector<144x128xf32> -> vector<144x128xf32>
    %c0_52 = arith.constant 0 : index
    %c0_53 = arith.constant 0 : index
    %44 = vector.load %arg5[%c0_52, %c0_53] : memref<144x128xf32, #tpu.memory_space<vmem>>, vector<144x128xf32>
    %45 = arith.addf %44, %43 : vector<144x128xf32>
    %c0_54 = arith.constant 0 : index
    %c0_55 = arith.constant 0 : index
    %46 = vector.load %arg5[%c0_54, %c0_55] : memref<144x128xf32, #tpu.memory_space<vmem>>, vector<144x128xf32>
    tpu.vector_store %arg5[%c0_54, %c0_55], %45 {strides = array<i32>} : memref<144x128xf32, #tpu.memory_space<vmem>>, vector<144x128xf32>,
    %c50 = arith.constant 50 : index
    %c0_56 = arith.constant 0 : index
    %47 = vector.load %arg1[%c50, %c0_56] : memref<200x128xbf16, #tpu.memory_space<vmem>>, vector<144x128xbf16>
    %c7 = arith.constant 7 : index
    %c0_57 = arith.constant 0 : index
    %c0_58 = arith.constant 0 : index
    %48 = vector.load %arg2[%c7, %c0_57, %c0_58] : memref<9x128x128xbf16, #tpu.memory_space<vmem>>, vector<1x128x128xbf16>
    %49 = vector.shape_cast %48 : vector<1x128x128xbf16> to vector<128x128xbf16>
    %cst_59 = arith.constant dense<0.000000e+00> : vector<144x128xf32>
    %50 = tpu.matmul %47, %49, %cst_59 {dimension_numbers = #tpu.dot_dimension_numbers<[1], [0], [0], [1], [0, 0, 1, 1], [], []>} : vector<144x128xbf16>, vector<128x128xbf16>, vector<144x128xf32> -> vector<144x128xf32>
    %c0_60 = arith.constant 0 : index
    %c0_61 = arith.constant 0 : index
    %51 = vector.load %arg5[%c0_60, %c0_61] : memref<144x128xf32, #tpu.memory_space<vmem>>, vector<144x128xf32>
    %52 = arith.addf %51, %50 : vector<144x128xf32>
    %c0_62 = arith.constant 0 : index
    %c0_63 = arith.constant 0 : index
    %53 = vector.load %arg5[%c0_62, %c0_63] : memref<144x128xf32, #tpu.memory_space<vmem>>, vector<144x128xf32>
    tpu.vector_store %arg5[%c0_62, %c0_63], %52 {strides = array<i32>} : memref<144x128xf32, #tpu.memory_space<vmem>>, vector<144x128xf32>,
    %c52 = arith.constant 52 : index
    %c0_64 = arith.constant 0 : index
    %54 = vector.load %arg1[%c52, %c0_64] : memref<200x128xbf16, #tpu.memory_space<vmem>>, vector<144x128xbf16>
    %c8 = arith.constant 8 : index
    %c0_65 = arith.constant 0 : index
    %c0_66 = arith.constant 0 : index
    %55 = vector.load %arg2[%c8, %c0_65, %c0_66] : memref<9x128x128xbf16, #tpu.memory_space<vmem>>, vector<1x128x128xbf16>
    %56 = vector.shape_cast %55 : vector<1x128x128xbf16> to vector<128x128xbf16>
    %cst_67 = arith.constant dense<0.000000e+00> : vector<144x128xf32>
    %57 = tpu.matmul %54, %56, %cst_67 {dimension_numbers = #tpu.dot_dimension_numbers<[1], [0], [0], [1], [0, 0, 1, 1], [], []>} : vector<144x128xbf16>, vector<128x128xbf16>, vector<144x128xf32> -> vector<144x128xf32>
    %c0_68 = arith.constant 0 : index
    %c0_69 = arith.constant 0 : index
    %58 = vector.load %arg5[%c0_68, %c0_69] : memref<144x128xf32, #tpu.memory_space<vmem>>, vector<144x128xf32>
    %59 = arith.addf %58, %57 : vector<144x128xf32>
    %c0_70 = arith.constant 0 : index
    %c0_71 = arith.constant 0 : index
    %60 = vector.load %arg5[%c0_70, %c0_71] : memref<144x128xf32, #tpu.memory_space<vmem>>, vector<144x128xf32>
    tpu.vector_store %arg5[%c0_70, %c0_71], %59 {strides = array<i32>} : memref<144x128xf32, #tpu.memory_space<vmem>>, vector<144x128xf32>,
    %c0_72 = arith.constant 0 : index
    %c0_73 = arith.constant 0 : index
    %61 = vector.load %arg5[%c0_72, %c0_73] : memref<144x128xf32, #tpu.memory_space<vmem>>, vector<144x128xf32>
    %c0_74 = arith.constant 0 : index
    %c0_75 = arith.constant 0 : index
    %62 = vector.load %arg3[%c0_74, %c0_75] : memref<1x128xf32, #tpu.memory_space<vmem>>, vector<1x128xf32>
    %63 = vector.broadcast %62 : vector<1x128xf32> to vector<144x128xf32>
    %64 = arith.addf %61, %63 : vector<144x128xf32>
    %cst_76 = arith.constant 0.000000e+00 : f32
    %65 = vector.broadcast %cst_76 : f32 to vector<144x128xf32>
    %66 = arith.maximumf %64, %65 : vector<144x128xf32>
    %67 = arith.truncf %66 : vector<144x128xf32> to vector<144x128xbf16>
    %c0_77 = arith.constant 0 : index
    %c0_78 = arith.constant 0 : index
    %68 = vector.load %arg4[%c0_77, %c0_78] : memref<144x128xbf16, #tpu.memory_space<vmem>>, vector<144x128xbf16>
    tpu.vector_store %arg4[%c0_77, %c0_78], %67 {strides = array<i32>} : memref<144x128xbf16, #tpu.memory_space<vmem>>, vector<144x128xbf16>,
    return
  }
  func.func @transform_0(%arg0: i32) -> (i32, i32) {
    %c0_i32 = arith.constant 0 : i32
    %c0_i32_0 = arith.constant 0 : i32
    %c0_i32_1 = arith.constant 0 : i32
    return %c0_i32, %c0_i32_0 : i32, i32
  }
  func.func @transform_1(%arg0: i32) -> (i32, i32, i32) {
    %c0_i32 = arith.constant 0 : i32
    %c0_i32_0 = arith.constant 0 : i32
    %c0_i32_1 = arith.constant 0 : i32
    return %c0_i32, %c0_i32_0, %arg0 : i32, i32, i32
  }
  func.func @transform_2(%arg0: i32) -> (i32, i32) {
    %c0_i32 = arith.constant 0 : i32
    %c0_i32_0 = arith.constant 0 : i32
    return %c0_i32, %arg0 : i32, i32
  }
  func.func @transform_3(%arg0: i32) -> (i32, i32) {
    %c0_i32 = arith.constant 0 : i32
    %c0_i32_0 = arith.constant 0 : i32
    return %c0_i32, %arg0 : i32, i32
  }
}

</mosaic_0001>

<llo_original>
// kernel: tpu_custom_call.1
$region0: #{tpu_custom_call.1}
  #allocation0 [shape = 'u32[]', space=smem, size = 0x4, offset = 0x4, fixed_abs, tag = 'smem constant byte address 0x4 - core index']
  #allocation1 [shape = 'u32[144,128]{1,0:T(1,128)}', space=vmem, size = 0x12000, scoped, tag = 'internal scratch']
  #allocation2 [shape = 'f32[144,128]{1,0:T(8,128)}', space=vmem, size = 0x12000, scoped, tag = 'scratch operand']
  %s0 = inlined_call_operand.hbm [shape: bf16[200,128], index: 0, kind: input, shape index: {}]
  %s1 = inlined_call_operand.hbm [shape: bf16[9,128,128], index: 1, kind: input, shape index: {}]
  %s2 = inlined_call_operand.vmem [shape: f32[1,128], index: 2, kind: input, shape index: {}]
  %s3 = inlined_call_operand.hbm [shape: bf16[144,128], index: 3, kind: output, shape index: {}]
  %s4 = sld [smem:[#allocation0]]
  $region30: #{tpu_custom_call.1} parent=0
    _
  %s6 = ssub.s32 1, %s4
  %s7 = scalar_select 0, %s6, %s4
  $region1: #{tpu_custom_call.1} parent=0
    #allocation3 [shape = 'u8[51200]{0}', space=vmem, size = 0xc800, scoped, tag = 'input window, operand 0, single buffered']
    #allocation4 [shape = 's32[1]{0}', space=sflag, size = 0x4, scoped, tag = 'scoped memory for tpu_custom_call.1']
    #allocation5 [shape = 's32[1]{0}', space=sflag, size = 0x4, scoped, tag = 'scoped memory for tpu_custom_call.1']
    #allocation6 [shape = 'u8[294912]{0}', space=vmem, size = 0x48000, scoped, tag = 'input window, operand 1, single buffered']
    #allocation7 [shape = 's32[1]{0}', space=sflag, size = 0x4, scoped, tag = 'scoped memory for tpu_custom_call.1']
    #allocation8 [shape = 'u8[36864]{0}', space=vmem, size = 0x9000, scoped, tag = 'output window, operand 0, single buffered']
    %8 = vsyncpa [#allocation4], 0
    %9 = vsyncpa [#allocation7], 0
    %10 = vsyncpa [#allocation5], 0
    // Predicated region
    $region2: #{tpu_custom_call.1} parent=1 // pred_check
      _
    $region3: #{tpu_custom_call.1} parent=1 // pred_check_branch
      %12 = sbr.rel (0) target = $region5
    $region4: #{tpu_custom_call.1} parent=1 // pred_region
      %s14 = ssub.s32 1600, 1600
      %15 = vsyncadd [#allocation4], %s14
      %s16 = sshll.u32 [#allocation3], 4
      %s17 = int_to_ptr.vmem [resolvable:$true] %s16
      %22 = dma.hbm_to_vmem [thread:$0]  %s0, 1600, %s17, [#allocation4], 64, 64, 4
    $region5: #{tpu_custom_call.1} parent=1 // pred_fallthru
      _
    // Predicated region
    $region6: #{tpu_custom_call.1} parent=1 // pred_check
      _
    $region7: #{tpu_custom_call.1} parent=1 // pred_check_branch
      %24 = sbr.rel (0) target = $region9
    $region8: #{tpu_custom_call.1} parent=1 // pred_region
      %s26 = ssub.s32 9216, 9216
      %27 = vsyncadd [#allocation7], %s26
      %s28 = sshll.u32 [#allocation6], 4
      %s29 = int_to_ptr.vmem [resolvable:$true] %s28
      %34 = dma.hbm_to_vmem [thread:$0]  %s1, 9216, %s29, [#allocation7], 64, 64, 4
    $region9: #{tpu_custom_call.1} parent=1 // pred_fallthru
      _
    // Predicated region
    $region10: #{tpu_custom_call.1} parent=1 // pred_check
      _
    $region11: #{tpu_custom_call.1} parent=1 // pred_check_branch
      %36 = sbr.rel (0) target = $region13
    $region12: #{tpu_custom_call.1} parent=1 // pred_region
      _
    $region13: #{tpu_custom_call.1} parent=1 // pred_fallthru
      _
    // Predicated region
    $region14: #{tpu_custom_call.1} parent=1 // pred_check
      _
    $region15: #{tpu_custom_call.1} parent=1 // pred_check_branch
      %38 = sbr.rel (0) target = $region17
    $region16: #{tpu_custom_call.1} parent=1 // pred_region
      %39 = dma.done [#allocation4], 1600
    $region17: #{tpu_custom_call.1} parent=1 // pred_fallthru
      _
    // Predicated region
    $region18: #{tpu_custom_call.1} parent=1 // pred_check
      _
    $region19: #{tpu_custom_call.1} parent=1 // pred_check_branch
      %41 = sbr.rel (0) target = $region21
    $region20: #{tpu_custom_call.1} parent=1 // pred_region
      %42 = dma.done [#allocation7], 9216
    $region21: #{tpu_custom_call.1} parent=1 // pred_fallthru
      _
    %v44 = vld [vmem:[#allocation3] sm:$0xf]
    %v45 = vld [vmem:[#allocation3 + $0x4] sm:$0xf]
    %v46 = vld [vmem:[#allocation3 + $0x8] sm:$0xf]
    %v47 = vld [vmem:[#allocation3 + $0xc] sm:$0xf]
    %v48 = vld [vmem:[#allocation3 + $0x10] sm:$0xf]
    %v49 = vld [vmem:[#allocation3 + $0x14] sm:$0xf]
    %v50 = vld [vmem:[#allocation3 + $0x18] sm:$0xf]
    %v51 = vld [vmem:[#allocation3 + $0x1c] sm:$0xf]
    %v52 = vld [vmem:[#allocation3 + $0x20] sm:$0xf]
    %v53 = vld [vmem:[#allocation3 + $0x24] sm:$0xf]
    %v54 = vld [vmem:[#allocation3 + $0x28] sm:$0xf]
    %v55 = vld [vmem:[#allocation3 + $0x2c] sm:$0xf]
    %v56 = vld [vmem:[#allocation3 + $0x30] sm:$0xf]
    %v57 = vld [vmem:[#allocation3 + $0x34] sm:$0xf]
    %v58 = vld [vmem:[#allocation3 + $0x38] sm:$0xf]
    %v59 = vld [vmem:[#allocation3 + $0x3c] sm:$0xf]
    %v60 = vld [vmem:[#allocation3 + $0x40] sm:$0xf]
    %v61 = vld [vmem:[#allocation3 + $0x44] sm:$0xf]
    %v62 = vld [vmem:[#allocation6] sm:$0xf]
    %v63 = vld [vmem:[#allocation6 + $0x4] sm:$0xf]
    %v64 = vld [vmem:[#allocation6 + $0x8] sm:$0xf]
    %v65 = vld [vmem:[#allocation6 + $0xc] sm:$0xf]
    %v66 = vld [vmem:[#allocation6 + $0x10] sm:$0xf]
    %v67 = vld [vmem:[#allocation6 + $0x14] sm:$0xf]
    %v68 = vld [vmem:[#allocation6 + $0x18] sm:$0xf]
    %v69 = vld [vmem:[#allocation6 + $0x1c] sm:$0xf]
    %v70 = vld [vmem:[#allocation6 + $0x20] sm:$0xf]
    %v71 = vld [vmem:[#allocation6 + $0x24] sm:$0xf]
    %v72 = vld [vmem:[#allocation6 + $0x28] sm:$0xf]
    %v73 = vld [vmem:[#allocation6 + $0x2c] sm:$0xf]
    %v74 = vld [vmem:[#allocation6 + $0x30] sm:$0xf]
    %v75 = vld [vmem:[#allocation6 + $0x34] sm:$0xf]
    %v76 = vld [vmem:[#allocation6 + $0x38] sm:$0xf]
    %v77 = vld [vmem:[#allocation6 + $0x3c] sm:$0xf]
    %v96 = vunpack.c.l.b16 %v44
    %v97 = vunpack.c.l.b16 %v45
    %v98 = vunpack.c.l.b16 %v46
    %v99 = vunpack.c.l.b16 %v47
    %v100 = vunpack.c.l.b16 %v48
    %v101 = vunpack.c.l.b16 %v49
    %v102 = vunpack.c.l.b16 %v50
    %v103 = vunpack.c.l.b16 %v51
    %v104 = vunpack.c.l.b16 %v52
    %v105 = vunpack.c.l.b16 %v53
    %v106 = vunpack.c.l.b16 %v54
    %v107 = vunpack.c.l.b16 %v55
    %v108 = vunpack.c.l.b16 %v56
    %v109 = vunpack.c.l.b16 %v57
    %v110 = vunpack.c.l.b16 %v58
    %v111 = vunpack.c.l.b16 %v59
    %v112 = vunpack.c.l.b16 %v60
    %v113 = vunpack.c.l.b16 %v61
    %v114 = vpack.c.b16 %v97, %v96
    %v115 = vpack.c.b16 %v99, %v98
    %v116 = vpack.c.b16 %v101, %v100
    %v117 = vpack.c.b16 %v103, %v102
    %v118 = vpack.c.b16 %v105, %v104
    %v119 = vpack.c.b16 %v107, %v106
    %v120 = vpack.c.b16 %v109, %v108
    %v121 = vpack.c.b16 %v111, %v110
    %v122 = vpack.c.b16 %v113, %v112
    %v148 = vunpack.c.l.b16 %v62
    %v149 = vunpack.c.l.b16 %v63
    %v150 = vunpack.c.l.b16 %v64
    %v151 = vunpack.c.l.b16 %v65
    %v152 = vunpack.c.l.b16 %v66
    %v153 = vunpack.c.l.b16 %v67
    %v154 = vunpack.c.l.b16 %v68
    %v155 = vunpack.c.l.b16 %v69
    %v156 = vunpack.c.l.b16 %v70
    %v157 = vunpack.c.l.b16 %v71
    %v158 = vunpack.c.l.b16 %v72
    %v159 = vunpack.c.l.b16 %v73
    %v160 = vunpack.c.l.b16 %v74
    %v161 = vunpack.c.l.b16 %v75
    %v162 = vunpack.c.l.b16 %v76
    %v163 = vunpack.c.l.b16 %v77
    %v164 = vpack.c.b16 %v149, %v148
    %v165 = vpack.c.b16 %v151, %v150
    %v166 = vpack.c.b16 %v153, %v152
    %v167 = vpack.c.b16 %v155, %v154
    %v168 = vpack.c.b16 %v157, %v156
    %v169 = vpack.c.b16 %v159, %v158
    %v170 = vpack.c.b16 %v161, %v160
    %v171 = vpack.c.b16 %v163, %v162
    %180 = vmatprep.subr.bf16.mxu0 0
    %181 = vmatpush1.bf16.msra.mxu0 %v164
    %182 = vmatprep.subr.bf16.mxu0 0
    %183 = vmatpush1.bf16.msra.mxu0 %v165
    %184 = vmatprep.subr.bf16.mxu0 0
    %185 = vmatpush1.bf16.msra.mxu0 %v166
    %186 = vmatprep.subr.bf16.mxu0 0
    %187 = vmatpush1.bf16.msra.mxu0 %v167
    %188 = vmatprep.subr.bf16.mxu0 0
    %189 = vmatpush1.bf16.msra.mxu0 %v168
    %190 = vmatprep.subr.bf16.mxu0 0
    %191 = vmatpush1.bf16.msra.mxu0 %v169
    %192 = vmatprep.subr.bf16.mxu0 0
    %193 = vmatpush1.bf16.msra.mxu0 %v170
    %194 = vmatprep.subr.bf16.mxu0 0
    %195 = vmatpush1.bf16.msra.mxu0 %v171
    %196 = vmatprep.subr.bf16.mxu0 0
    %197 = vmatpush1.bf16.msra.mxu0 0
    %198 = vmatprep.subr.bf16.mxu0 0
    %199 = vmatpush1.bf16.msra.mxu0 0
    %200 = vmatprep.subr.bf16.mxu0 0
    %201 = vmatpush1.bf16.msra.mxu0 0
    %202 = vmatprep.subr.bf16.mxu0 0
    %203 = vmatpush1.bf16.msra.mxu0 0
    %204 = vmatprep.subr.bf16.mxu0 0
    %205 = vmatpush1.bf16.msra.mxu0 0
    %206 = vmatprep.subr.bf16.mxu0 0
    %207 = vmatpush1.bf16.msra.mxu0 0
    %208 = vmatprep.subr.bf16.mxu0 0
    %209 = vmatpush1.bf16.msra.mxu0 0
    %210 = vmatprep.subr.bf16.mxu0 0
    %211 = vmatpush1.bf16.msra.mxu0 0
    %212 = vmatprep.mubr.bf16.mxu0 0
    %213 = vmatmul.mubr.bf16.gmra.mrb[0].mxu0 %v114
    %v214 = vpop.f32.mrb[0].mxu0
    %v215 = vadd.f32 0.0, %v214
    %v216 = vpop.f32.mrb[0].mxu0
    %v217 = vpop.f32.mrb[0].mxu0
    %v218 = vadd.f32 0.0, %v217
    %v219 = vpop.f32.mrb[0].mxu0
    %220 = vmatprep.mubr.bf16.mxu0 0
    %221 = vmatmul.mubr.bf16.gmra.mrb[0].mxu0 %v115
    %v222 = vpop.f32.mrb[0].mxu0
    %v223 = vadd.f32 0.0, %v222
    %v224 = vpop.f32.mrb[0].mxu0
    %v225 = vpop.f32.mrb[0].mxu0
    %v226 = vadd.f32 0.0, %v225
    %v227 = vpop.f32.mrb[0].mxu0
    %228 = vmatprep.mubr.bf16.mxu0 0
    %229 = vmatmul.mubr.bf16.gmra.mrb[0].mxu0 %v116
    %v230 = vpop.f32.mrb[0].mxu0
    %v231 = vadd.f32 0.0, %v230
    %v232 = vpop.f32.mrb[0].mxu0
    %v233 = vpop.f32.mrb[0].mxu0
    %v234 = vadd.f32 0.0, %v233
    %v235 = vpop.f32.mrb[0].mxu0
    %236 = vmatprep.mubr.bf16.mxu0 0
    %237 = vmatmul.mubr.bf16.gmra.mrb[0].mxu0 %v117
    %v238 = vpop.f32.mrb[0].mxu0
    %v239 = vadd.f32 0.0, %v238
    %v240 = vpop.f32.mrb[0].mxu0
    %v241 = vpop.f32.mrb[0].mxu0
    %v242 = vadd.f32 0.0, %v241
    %v243 = vpop.f32.mrb[0].mxu0
    %244 = vmatprep.mubr.bf16.mxu0 0
    %245 = vmatmul.mubr.bf16.gmra.mrb[0].mxu0 %v118
    %v246 = vpop.f32.mrb[0].mxu0
    %v247 = vadd.f32 0.0, %v246
    %v248 = vpop.f32.mrb[0].mxu0
    %v249 = vpop.f32.mrb[0].mxu0
    %v250 = vadd.f32 0.0, %v249
    %v251 = vpop.f32.mrb[0].mxu0
    %252 = vmatprep.mubr.bf16.mxu0 0
    %253 = vmatmul.mubr.bf16.gmra.mrb[0].mxu0 %v119
    %v254 = vpop.f32.mrb[0].mxu0
    %v255 = vadd.f32 0.0, %v254
    %v256 = vpop.f32.mrb[0].mxu0
    %v257 = vpop.f32.mrb[0].mxu0
    %v258 = vadd.f32 0.0, %v257
    %v259 = vpop.f32.mrb[0].mxu0
    %260 = vmatprep.mubr.bf16.mxu0 0
    %261 = vmatmul.mubr.bf16.gmra.mrb[0].mxu0 %v120
    %v262 = vpop.f32.mrb[0].mxu0
    %v263 = vadd.f32 0.0, %v262
    %v264 = vpop.f32.mrb[0].mxu0
    %v265 = vpop.f32.mrb[0].mxu0
    %v266 = vadd.f32 0.0, %v265
    %v267 = vpop.f32.mrb[0].mxu0
    %268 = vmatprep.mubr.bf16.mxu0 0
    %269 = vmatmul.mubr.bf16.gmra.mrb[0].mxu0 %v121
    %v270 = vpop.f32.mrb[0].mxu0
    %v271 = vadd.f32 0.0, %v270
    %v272 = vpop.f32.mrb[0].mxu0
    %v273 = vpop.f32.mrb[0].mxu0
    %v274 = vadd.f32 0.0, %v273
    %v275 = vpop.f32.mrb[0].mxu0
    %276 = vmatprep.mubr.bf16.mxu0 0
    %277 = vmatmul.mubr.bf16.gmra.mrb[0].mxu0 %v122
    %v278 = vpop.f32.mrb[0].mxu0
    %v279 = vadd.f32 0.0, %v278
    %v280 = vpop.f32.mrb[0].mxu0
    %v281 = vpop.f32.mrb[0].mxu0
    %v282 = vadd.f32 0.0, %v281
    %v283 = vpop.f32.mrb[0].mxu0
    %284 = vdwg.mxu0
    %285 = vst [vmem:[#allocation2] sm:$0xff] %v215
    %286 = vst [vmem:[#allocation2 + $0x8] sm:$0xff] %v218
    %287 = vst [vmem:[#allocation2 + $0x10] sm:$0xff] %v223
    %288 = vst [vmem:[#allocation2 + $0x18] sm:$0xff] %v226
    %289 = vst [vmem:[#allocation2 + $0x20] sm:$0xff] %v231
    %290 = vst [vmem:[#allocation2 + $0x28] sm:$0xff] %v234
    %291 = vst [vmem:[#allocation2 + $0x30] sm:$0xff] %v239
    %292 = vst [vmem:[#allocation2 + $0x38] sm:$0xff] %v242
    %293 = vst [vmem:[#allocation2 + $0x40] sm:$0xff] %v247
    %294 = vst [vmem:[#allocation2 + $0x48] sm:$0xff] %v250
    %295 = vst [vmem:[#allocation2 + $0x50] sm:$0xff] %v255
    %296 = vst [vmem:[#allocation2 + $0x58] sm:$0xff] %v258
    %297 = vst [vmem:[#allocation2 + $0x60] sm:$0xff] %v263
    %298 = vst [vmem:[#allocation2 + $0x68] sm:$0xff] %v266
    %299 = vst [vmem:[#allocation2 + $0x70] sm:$0xff] %v271
    %300 = vst [vmem:[#allocation2 + $0x78] sm:$0xff] %v274
    %301 = vst [vmem:[#allocation2 + $0x80] sm:$0xff] %v279
    %302 = vst [vmem:[#allocation2 + $0x88] sm:$0xff] %v282
    %v303 = vld [vmem:[#allocation3] sm:$0xe]
    %v304 = vld [vmem:[#allocation3 + $0x4] sm:$0xf]
    %v305 = vld [vmem:[#allocation3 + $0x8] sm:$0xf]
    %v306 = vld [vmem:[#allocation3 + $0xc] sm:$0xf]
    %v307 = vld [vmem:[#allocation3 + $0x10] sm:$0xf]
    %v308 = vld [vmem:[#allocation3 + $0x14] sm:$0xf]
    %v309 = vld [vmem:[#allocation3 + $0x18] sm:$0xf]
    %v310 = vld [vmem:[#allocation3 + $0x1c] sm:$0xf]
    %v311 = vld [vmem:[#allocation3 + $0x20] sm:$0xf]
    %v312 = vld [vmem:[#allocation3 + $0x24] sm:$0xf]
    %v313 = vld [vmem:[#allocation3 + $0x28] sm:$0xf]
    %v314 = vld [vmem:[#allocation3 + $0x2c] sm:$0xf]
    %v315 = vld [vmem:[#allocation3 + $0x30] sm:$0xf]
    %v316 = vld [vmem:[#allocation3 + $0x34] sm:$0xf]
    %v317 = vld [vmem:[#allocation3 + $0x38] sm:$0xf]
    %v318 = vld [vmem:[#allocation3 + $0x3c] sm:$0xf]
    %v319 = vld [vmem:[#allocation3 + $0x40] sm:$0xf]
    %v320 = vld [vmem:[#allocation3 + $0x44] sm:$0xf]
    %v321 = vld [vmem:[#allocation3 + $0x48] sm:$0x1]
    %s322 = scalar_lea.vmem [#allocation6], 64
    %v323 = vld [vmem:[%s322] sm:$0xf]
    %v324 = vld [vmem:[%s322 + $0x4] sm:$0xf]
    %v325 = vld [vmem:[%s322 + $0x8] sm:$0xf]
    %v326 = vld [vmem:[%s322 + $0xc] sm:$0xf]
    %v327 = vld [vmem:[%s322 + $0x10] sm:$0xf]
    %v328 = vld [vmem:[%s322 + $0x14] sm:$0xf]
    %v329 = vld [vmem:[%s322 + $0x18] sm:$0xf]
    %v330 = vld [vmem:[%s322 + $0x1c] sm:$0xf]
    %v331 = vld [vmem:[%s322 + $0x20] sm:$0xf]
    %v332 = vld [vmem:[%s322 + $0x24] sm:$0xf]
    %v333 = vld [vmem:[%s322 + $0x28] sm:$0xf]
    %v334 = vld [vmem:[%s322 + $0x2c] sm:$0xf]
    %v335 = vld [vmem:[%s322 + $0x30] sm:$0xf]
    %v336 = vld [vmem:[%s322 + $0x34] sm:$0xf]
    %v337 = vld [vmem:[%s322 + $0x38] sm:$0xf]
    %v338 = vld [vmem:[%s322 + $0x3c] sm:$0xf]
    %v358 = vunpack.c.l.b16 %v303
    %v359 = vunpack.c.l.b16 %v304
    %v360 = vunpack.c.l.b16 %v305
    %v361 = vunpack.c.l.b16 %v306
    %v362 = vunpack.c.l.b16 %v307
    %v363 = vunpack.c.l.b16 %v308
    %v364 = vunpack.c.l.b16 %v309
    %v365 = vunpack.c.l.b16 %v310
    %v366 = vunpack.c.l.b16 %v311
    %v367 = vunpack.c.l.b16 %v312
    %v368 = vunpack.c.l.b16 %v313
    %v369 = vunpack.c.l.b16 %v314
    %v370 = vunpack.c.l.b16 %v315
    %v371 = vunpack.c.l.b16 %v316
    %v372 = vunpack.c.l.b16 %v317
    %v373 = vunpack.c.l.b16 %v318
    %v374 = vunpack.c.l.b16 %v319
    %v375 = vunpack.c.l.b16 %v320
    %v376 = vunpack.c.l.b16 %v321
    %v377 = vpack.c.b16 %v359, %v358
    %v378 = vpack.c.b16 %v361, %v360
    %v379 = vpack.c.b16 %v363, %v362
    %v380 = vpack.c.b16 %v365, %v364
    %v381 = vpack.c.b16 %v367, %v366
    %v382 = vpack.c.b16 %v369, %v368
    %v383 = vpack.c.b16 %v371, %v370
    %v384 = vpack.c.b16 %v373, %v372
    %v385 = vpack.c.b16 %v375, %v374
    %v386 = vpack.c.b16 %v376, %v376
    %vm387 = vcmask 1046528
    %v388 = vrot.slane %v377, 1
    %v389 = vrot.slane %v378, 1
    %v390 = vsel %vm387, %v388, %v389
    %v391 = vrot.slane %v379, 1
    %v392 = vsel %vm387, %v389, %v391
    %v393 = vrot.slane %v380, 1
    %v394 = vsel %vm387, %v391, %v393
    %v395 = vrot.slane %v381, 1
    %v396 = vsel %vm387, %v393, %v395
    %v397 = vrot.slane %v382, 1
    %v398 = vsel %vm387, %v395, %v397
    %v399 = vrot.slane %v383, 1
    %v400 = vsel %vm387, %v397, %v399
    %v401 = vrot.slane %v384, 1
    %v402 = vsel %vm387, %v399, %v401
    %v403 = vrot.slane %v385, 1
    %v404 = vsel %vm387, %v401, %v403
    %v405 = vrot.slane %v386, 1
    %v406 = vsel %vm387, %v403, %v405
    %v432 = vunpack.c.l.b16 %v323
    %v433 = vunpack.c.l.b16 %v324
    %v434 = vunpack.c.l.b16 %v325
    %v435 = vunpack.c.l.b16 %v326
    %v436 = vunpack.c.l.b16 %v327
    %v437 = vunpack.c.l.b16 %v328
    %v438 = vunpack.c.l.b16 %v329
    %v439 = vunpack.c.l.b16 %v330
    %v440 = vunpack.c.l.b16 %v331
    %v441 = vunpack.c.l.b16 %v332
    %v442 = vunpack.c.l.b16 %v333
    %v443 = vunpack.c.l.b16 %v334
    %v444 = vunpack.c.l.b16 %v335
    %v445 = vunpack.c.l.b16 %v336
    %v446 = vunpack.c.l.b16 %v337
    %v447 = vunpack.c.l.b16 %v338
    %v448 = vpack.c.b16 %v433, %v432
    %v449 = vpack.c.b16 %v435, %v434
    %v450 = vpack.c.b16 %v437, %v436
    %v451 = vpack.c.b16 %v439, %v438
    %v452 = vpack.c.b16 %v441, %v440
    %v453 = vpack.c.b16 %v443, %v442
    %v454 = vpack.c.b16 %v445, %v444
    %v455 = vpack.c.b16 %v447, %v446
    %464 = vmatprep.subr.bf16.mxu0 0
    %465 = vmatpush1.bf16.msra.mxu0 %v448
    %466 = vmatprep.subr.bf16.mxu0 0
    %467 = vmatpush1.bf16.msra.mxu0 %v449
    %468 = vmatprep.subr.bf16.mxu0 0
    %469 = vmatpush1.bf16.msra.mxu0 %v450
    %470 = vmatprep.subr.bf16.mxu0 0
    %471 = vmatpush1.bf16.msra.mxu0 %v451
    %472 = vmatprep.subr.bf16.mxu0 0
    %473 = vmatpush1.bf16.msra.mxu0 %v452
    %474 = vmatprep.subr.bf16.mxu0 0
    %475 = vmatpush1.bf16.msra.mxu0 %v453
    %476 = vmatprep.subr.bf16.mxu0 0
    %477 = vmatpush1.bf16.msra.mxu0 %v454
    %478 = vmatprep.subr.bf16.mxu0 0
    %479 = vmatpush1.bf16.msra.mxu0 %v455
    %480 = vmatprep.subr.bf16.mxu0 0
    %481 = vmatpush1.bf16.msra.mxu0 0
    %482 = vmatprep.subr.bf16.mxu0 0
    %483 = vmatpush1.bf16.msra.mxu0 0
    %484 = vmatprep.subr.bf16.mxu0 0
    %485 = vmatpush1.bf16.msra.mxu0 0
    %486 = vmatprep.subr.bf16.mxu0 0
    %487 = vmatpush1.bf16.msra.mxu0 0
    %488 = vmatprep.subr.bf16.mxu0 0
    %489 = vmatpush1.bf16.msra.mxu0 0
    %490 = vmatprep.subr.bf16.mxu0 0
    %491 = vmatpush1.bf16.msra.mxu0 0
    %492 = vmatprep.subr.bf16.mxu0 0
    %493 = vmatpush1.bf16.msra.mxu0 0
    %494 = vmatprep.subr.bf16.mxu0 0
    %495 = vmatpush1.bf16.msra.mxu0 0
    %496 = vmatprep.mubr.bf16.mxu0 0
    %497 = vmatmul.mubr.bf16.gmra.mrb[0].mxu0 %v390
    %v498 = vpop.f32.mrb[0].mxu0
    %v499 = vadd.f32 0.0, %v498
    %v500 = vpop.f32.mrb[0].mxu0
    %v501 = vpop.f32.mrb[0].mxu0
    %v502 = vadd.f32 0.0, %v501
    %v503 = vpop.f32.mrb[0].mxu0
    %504 = vmatprep.mubr.bf16.mxu0 0
    %505 = vmatmul.mubr.bf16.gmra.mrb[0].mxu0 %v392
    %v506 = vpop.f32.mrb[0].mxu0
    %v507 = vadd.f32 0.0, %v506
    %v508 = vpop.f32.mrb[0].mxu0
    %v509 = vpop.f32.mrb[0].mxu0
    %v510 = vadd.f32 0.0, %v509
    %v511 = vpop.f32.mrb[0].mxu0
    %512 = vmatprep.mubr.bf16.mxu0 0
    %513 = vmatmul.mubr.bf16.gmra.mrb[0].mxu0 %v394
    %v514 = vpop.f32.mrb[0].mxu0
    %v515 = vadd.f32 0.0, %v514
    %v516 = vpop.f32.mrb[0].mxu0
    %v517 = vpop.f32.mrb[0].mxu0
    %v518 = vadd.f32 0.0, %v517
    %v519 = vpop.f32.mrb[0].mxu0
    %520 = vmatprep.mubr.bf16.mxu0 0
    %521 = vmatmul.mubr.bf16.gmra.mrb[0].mxu0 %v396
    %v522 = vpop.f32.mrb[0].mxu0
    %v523 = vadd.f32 0.0, %v522
    %v524 = vpop.f32.mrb[0].mxu0
    %v525 = vpop.f32.mrb[0].mxu0
    %v526 = vadd.f32 0.0, %v525
    %v527 = vpop.f32.mrb[0].mxu0
    %528 = vmatprep.mubr.bf16.mxu0 0
    %529 = vmatmul.mubr.bf16.gmra.mrb[0].mxu0 %v398
    %v530 = vpop.f32.mrb[0].mxu0
    %v531 = vadd.f32 0.0, %v530
    %v532 = vpop.f32.mrb[0].mxu0
    %v533 = vpop.f32.mrb[0].mxu0
    %v534 = vadd.f32 0.0, %v533
    %v535 = vpop.f32.mrb[0].mxu0
    %536 = vmatprep.mubr.bf16.mxu0 0
    %537 = vmatmul.mubr.bf16.gmra.mrb[0].mxu0 %v400
    %v538 = vpop.f32.mrb[0].mxu0
    %v539 = vadd.f32 0.0, %v538
    %v540 = vpop.f32.mrb[0].mxu0
    %v541 = vpop.f32.mrb[0].mxu0
    %v542 = vadd.f32 0.0, %v541
    %v543 = vpop.f32.mrb[0].mxu0
    %544 = vmatprep.mubr.bf16.mxu0 0
    %545 = vmatmul.mubr.bf16.gmra.mrb[0].mxu0 %v402
    %v546 = vpop.f32.mrb[0].mxu0
    %v547 = vadd.f32 0.0, %v546
    %v548 = vpop.f32.mrb[0].mxu0
    %v549 = vpop.f32.mrb[0].mxu0
    %v550 = vadd.f32 0.0, %v549
    %v551 = vpop.f32.mrb[0].mxu0
    %552 = vmatprep.mubr.bf16.mxu0 0
    %553 = vmatmul.mubr.bf16.gmra.mrb[0].mxu0 %v404
    %v554 = vpop.f32.mrb[0].mxu0
    %v555 = vadd.f32 0.0, %v554
    %v556 = vpop.f32.mrb[0].mxu0
    %v557 = vpop.f32.mrb[0].mxu0
    %v558 = vadd.f32 0.0, %v557
    %v559 = vpop.f32.mrb[0].mxu0
    %560 = vmatprep.mubr.bf16.mxu0 0
    %561 = vmatmul.mubr.bf16.gmra.mrb[0].mxu0 %v406
    %v562 = vpop.f32.mrb[0].mxu0
    %v563 = vadd.f32 0.0, %v562
    %v564 = vpop.f32.mrb[0].mxu0
    %v565 = vpop.f32.mrb[0].mxu0
    %v566 = vadd.f32 0.0, %v565
    %v567 = vpop.f32.mrb[0].mxu0
    %568 = vdwg.mxu0
    %v569 = vld [vmem:[#allocation2] sm:$0xff]
    %v570 = vld [vmem:[#allocation2 + $0x8] sm:$0xff]
    %v571 = vld [vmem:[#allocation2 + $0x10] sm:$0xff]
    %v572 = vld [vmem:[#allocation2 + $0x18] sm:$0xff]
    %v573 = vld [vmem:[#allocation2 + $0x20] sm:$0xff]
    %v574 = vld [vmem:[#allocation2 + $0x28] sm:$0xff]
    %v575 = vld [vmem:[#allocation2 + $0x30] sm:$0xff]
    %v576 = vld [vmem:[#allocation2 + $0x38] sm:$0xff]
    %v577 = vld [vmem:[#allocation2 + $0x40] sm:$0xff]
    %v578 = vld [vmem:[#allocation2 + $0x48] sm:$0xff]
    %v579 = vld [vmem:[#allocation2 + $0x50] sm:$0xff]
    %v580 = vld [vmem:[#allocation2 + $0x58] sm:$0xff]
    %v581 = vld [vmem:[#allocation2 + $0x60] sm:$0xff]
    %v582 = vld [vmem:[#allocation2 + $0x68] sm:$0xff]
    %v583 = vld [vmem:[#allocation2 + $0x70] sm:$0xff]
    %v584 = vld [vmem:[#allocation2 + $0x78] sm:$0xff]
    %v585 = vld [vmem:[#allocation2 + $0x80] sm:$0xff]
    %v586 = vld [vmem:[#allocation2 + $0x88] sm:$0xff]
    %v587 = vadd.f32 %v569, %v499
    %v588 = vadd.f32 %v570, %v502
    %v589 = vadd.f32 %v571, %v507
    %v590 = vadd.f32 %v572, %v510
    %v591 = vadd.f32 %v573, %v515
    %v592 = vadd.f32 %v574, %v518
    %v593 = vadd.f32 %v575, %v523
    %v594 = vadd.f32 %v576, %v526
    %v595 = vadd.f32 %v577, %v531
    %v596 = vadd.f32 %v578, %v534
    %v597 = vadd.f32 %v579, %v539
    %v598 = vadd.f32 %v580, %v542
    %v599 = vadd.f32 %v581, %v547
    %v600 = vadd.f32 %v582, %v550
    %v601 = vadd.f32 %v583, %v555
    %v602 = vadd.f32 %v584, %v558
    %v603 = vadd.f32 %v585, %v563
    %v604 = vadd.f32 %v586, %v566
    %605 = vst [vmem:[#allocation2] sm:$0xff] %v587
    %606 = vst [vmem:[#allocation2 + $0x8] sm:$0xff] %v588
    %607 = vst [vmem:[#allocation2 + $0x10] sm:$0xff] %v589
    %608 = vst [vmem:[#allocation2 + $0x18] sm:$0xff] %v590
    %609 = vst [vmem:[#allocation2 + $0x20] sm:$0xff] %v591
    %610 = vst [vmem:[#allocation2 + $0x28] sm:$0xff] %v592
    %611 = vst [vmem:[#allocation2 + $0x30] sm:$0xff] %v593
    %612 = vst [vmem:[#allocation2 + $0x38] sm:$0xff] %v594
    %613 = vst [vmem:[#allocation2 + $0x40] sm:$0xff] %v595
    %614 = vst [vmem:[#allocation2 + $0x48] sm:$0xff] %v596
    %615 = vst [vmem:[#allocation2 + $0x50] sm:$0xff] %v597
    %616 = vst [vmem:[#allocation2 + $0x58] sm:$0xff] %v598
    %617 = vst [vmem:[#allocation2 + $0x60] sm:$0xff] %v599
    %618 = vst [vmem:[#allocation2 + $0x68] sm:$0xff] %v600
    %619 = vst [vmem:[#allocation2 + $0x70] sm:$0xff] %v601
    %620 = vst [vmem:[#allocation2 + $0x78] sm:$0xff] %v602
    %621 = vst [vmem:[#allocation2 + $0x80] sm:$0xff] %v603
    %622 = vst [vmem:[#allocation2 + $0x88] sm:$0xff] %v604
    %v623 = vld [vmem:[#allocation3] sm:$0xc]
    %v624 = vld [vmem:[#allocation3 + $0x4] sm:$0xf]
    %v625 = vld [vmem:[#allocation3 + $0x8] sm:$0xf]
    %v626 = vld [vmem:[#allocation3 + $0xc] sm:$0xf]
    %v627 = vld [vmem:[#allocation3 + $0x10] sm:$0xf]
    %v628 = vld [vmem:[#allocation3 + $0x14] sm:$0xf]
    %v629 = vld [vmem:[#allocation3 + $0x18] sm:$0xf]
    %v630 = vld [vmem:[#allocation3 + $0x1c] sm:$0xf]
    %v631 = vld [vmem:[#allocation3 + $0x20] sm:$0xf]
    %v632 = vld [vmem:[#allocation3 + $0x24] sm:$0xf]
    %v633 = vld [vmem:[#allocation3 + $0x28] sm:$0xf]
    %v634 = vld [vmem:[#allocation3 + $0x2c] sm:$0xf]
    %v635 = vld [vmem:[#allocation3 + $0x30] sm:$0xf]
    %v636 = vld [vmem:[#allocation3 + $0x34] sm:$0xf]
    %v637 = vld [vmem:[#allocation3 + $0x38] sm:$0xf]
    %v638 = vld [vmem:[#allocation3 + $0x3c] sm:$0xf]
    %v639 = vld [vmem:[#allocation3 + $0x40] sm:$0xf]
    %v640 = vld [vmem:[#allocation3 + $0x44] sm:$0xf]
    %v641 = vld [vmem:[#allocation3 + $0x48] sm:$0x3]
    %s642 = scalar_lea.vmem [#allocation6], 128
    %v643 = vld [vmem:[%s642] sm:$0xf]
    %v644 = vld [vmem:[%s642 + $0x4] sm:$0xf]
    %v645 = vld [vmem:[%s642 + $0x8] sm:$0xf]
    %v646 = vld [vmem:[%s642 + $0xc] sm:$0xf]
    %v647 = vld [vmem:[%s642 + $0x10] sm:$0xf]
    %v648 = vld [vmem:[%s642 + $0x14] sm:$0xf]
    %v649 = vld [vmem:[%s642 + $0x18] sm:$0xf]
    %v650 = vld [vmem:[%s642 + $0x1c] sm:$0xf]
    %v651 = vld [vmem:[%s642 + $0x20] sm:$0xf]
    %v652 = vld [vmem:[%s642 + $0x24] sm:$0xf]
    %v653 = vld [vmem:[%s642 + $0x28] sm:$0xf]
    %v654 = vld [vmem:[%s642 + $0x2c] sm:$0xf]
    %v655 = vld [vmem:[%s642 + $0x30] sm:$0xf]
    %v656 = vld [vmem:[%s642 + $0x34] sm:$0xf]
    %v657 = vld [vmem:[%s642 + $0x38] sm:$0xf]
    %v658 = vld [vmem:[%s642 + $0x3c] sm:$0xf]
    %v678 = vunpack.c.l.b16 %v623
    %v679 = vunpack.c.l.b16 %v624
    %v680 = vunpack.c.l.b16 %v625
    %v681 = vunpack.c.l.b16 %v626
    %v682 = vunpack.c.l.b16 %v627
    %v683 = vunpack.c.l.b16 %v628
    %v684 = vunpack.c.l.b16 %v629
    %v685 = vunpack.c.l.b16 %v630
    %v686 = vunpack.c.l.b16 %v631
    %v687 = vunpack.c.l.b16 %v632
    %v688 = vunpack.c.l.b16 %v633
    %v689 = vunpack.c.l.b16 %v634
    %v690 = vunpack.c.l.b16 %v635
    %v691 = vunpack.c.l.b16 %v636
    %v692 = vunpack.c.l.b16 %v637
    %v693 = vunpack.c.l.b16 %v638
    %v694 = vunpack.c.l.b16 %v639
    %v695 = vunpack.c.l.b16 %v640
    %v696 = vunpack.c.l.b16 %v641
    %v697 = vpack.c.b16 %v679, %v678
    %v698 = vpack.c.b16 %v681, %v680
    %v699 = vpack.c.b16 %v683, %v682
    %v700 = vpack.c.b16 %v685, %v684
    %v701 = vpack.c.b16 %v687, %v686
    %v702 = vpack.c.b16 %v689, %v688
    %v703 = vpack.c.b16 %v691, %v690
    %v704 = vpack.c.b16 %v693, %v692
    %v705 = vpack.c.b16 %v695, %v694
    %v706 = vpack.c.b16 %v696, %v696
    %vm707 = vcmask 1045504
    %v708 = vrot.slane %v697, 2
    %v709 = vrot.slane %v698, 2
    %v710 = vsel %vm707, %v708, %v709
    %v711 = vrot.slane %v699, 2
    %v712 = vsel %vm707, %v709, %v711
    %v713 = vrot.slane %v700, 2
    %v714 = vsel %vm707, %v711, %v713
    %v715 = vrot.slane %v701, 2
    %v716 = vsel %vm707, %v713, %v715
    %v717 = vrot.slane %v702, 2
    %v718 = vsel %vm707, %v715, %v717
    %v719 = vrot.slane %v703, 2
    %v720 = vsel %vm707, %v717, %v719
    %v721 = vrot.slane %v704, 2
    %v722 = vsel %vm707, %v719, %v721
    %v723 = vrot.slane %v705, 2
    %v724 = vsel %vm707, %v721, %v723
    %v725 = vrot.slane %v706, 2
    %v726 = vsel %vm707, %v723, %v725
    %v752 = vunpack.c.l.b16 %v643
    %v753 = vunpack.c.l.b16 %v644
    %v754 = vunpack.c.l.b16 %v645
    %v755 = vunpack.c.l.b16 %v646
    %v756 = vunpack.c.l.b16 %v647
    %v757 = vunpack.c.l.b16 %v648
    %v758 = vunpack.c.l.b16 %v649
    %v759 = vunpack.c.l.b16 %v650
    %v760 = vunpack.c.l.b16 %v651
    %v761 = vunpack.c.l.b16 %v652
    %v762 = vunpack.c.l.b16 %v653
    %v763 = vunpack.c.l.b16 %v654
    %v764 = vunpack.c.l.b16 %v655
    %v765 = vunpack.c.l.b16 %v656
    %v766 = vunpack.c.l.b16 %v657
    %v767 = vunpack.c.l.b16 %v658
    %v768 = vpack.c.b16 %v753, %v752
    %v769 = vpack.c.b16 %v755, %v754
    %v770 = vpack.c.b16 %v757, %v756
    %v771 = vpack.c.b16 %v759, %v758
    %v772 = vpack.c.b16 %v761, %v760
    %v773 = vpack.c.b16 %v763, %v762
    %v774 = vpack.c.b16 %v765, %v764
    %v775 = vpack.c.b16 %v767, %v766
    %784 = vmatprep.subr.bf16.mxu0 0
    %785 = vmatpush1.bf16.msra.mxu0 %v768
    %786 = vmatprep.subr.bf16.mxu0 0
    %787 = vmatpush1.bf16.msra.mxu0 %v769
    %788 = vmatprep.subr.bf16.mxu0 0
    %789 = vmatpush1.bf16.msra.mxu0 %v770
    %790 = vmatprep.subr.bf16.mxu0 0
    %791 = vmatpush1.bf16.msra.mxu0 %v771
    %792 = vmatprep.subr.bf16.mxu0 0
    %793 = vmatpush1.bf16.msra.mxu0 %v772
    %794 = vmatprep.subr.bf16.mxu0 0
    %795 = vmatpush1.bf16.msra.mxu0 %v773
    %796 = vmatprep.subr.bf16.mxu0 0
    %797 = vmatpush1.bf16.msra.mxu0 %v774
    %798 = vmatprep.subr.bf16.mxu0 0
    %799 = vmatpush1.bf16.msra.mxu0 %v775
    %800 = vmatprep.subr.bf16.mxu0 0
    %801 = vmatpush1.bf16.msra.mxu0 0
    %802 = vmatprep.subr.bf16.mxu0 0
    %803 = vmatpush1.bf16.msra.mxu0 0
    %804 = vmatprep.subr.bf16.mxu0 0
    %805 = vmatpush1.bf16.msra.mxu0 0
    %806 = vmatprep.subr.bf16.mxu0 0
    %807 = vmatpush1.bf16.msra.mxu0 0
    %808 = vmatprep.subr.bf16.mxu0 0
    %809 = vmatpush1.bf16.msra.mxu0 0
    %810 = vmatprep.subr.bf16.mxu0 0
    %811 = vmatpush1.bf16.msra.mxu0 0
    %812 = vmatprep.subr.bf16.mxu0 0
    %813 = vmatpush1.bf16.msra.mxu0 0
    %814 = vmatprep.subr.bf16.mxu0 0
    %815 = vmatpush1.bf16.msra.mxu0 0
    %816 = vmatprep.mubr.bf16.mxu0 0
    %817 = vmatmul.mubr.bf16.gmra.mrb[0].mxu0 %v710
    %v818 = vpop.f32.mrb[0].mxu0
    %v819 = vadd.f32 0.0, %v818
    %v820 = vpop.f32.mrb[0].mxu0
    %v821 = vpop.f32.mrb[0].mxu0
    %v822 = vadd.f32 0.0, %v821
    %v823 = vpop.f32.mrb[0].mxu0
    %824 = vmatprep.mubr.bf16.mxu0 0
    %825 = vmatmul.mubr.bf16.gmra.mrb[0].mxu0 %v712
    %v826 = vpop.f32.mrb[0].mxu0
    %v827 = vadd.f32 0.0, %v826
    %v828 = vpop.f32.mrb[0].mxu0
    %v829 = vpop.f32.mrb[0].mxu0
    %v830 = vadd.f32 0.0, %v829
    %v831 = vpop.f32.mrb[0].mxu0
    %832 = vmatprep.mubr.bf16.mxu0 0
    %833 = vmatmul.mubr.bf16.gmra.mrb[0].mxu0 %v714
    %v834 = vpop.f32.mrb[0].mxu0
    %v835 = vadd.f32 0.0, %v834
    %v836 = vpop.f32.mrb[0].mxu0
    %v837 = vpop.f32.mrb[0].mxu0
    %v838 = vadd.f32 0.0, %v837
    %v839 = vpop.f32.mrb[0].mxu0
    %840 = vmatprep.mubr.bf16.mxu0 0
    %841 = vmatmul.mubr.bf16.gmra.mrb[0].mxu0 %v716
    %v842 = vpop.f32.mrb[0].mxu0
    %v843 = vadd.f32 0.0, %v842
    %v844 = vpop.f32.mrb[0].mxu0
    %v845 = vpop.f32.mrb[0].mxu0
    %v846 = vadd.f32 0.0, %v845
    %v847 = vpop.f32.mrb[0].mxu0
    %848 = vmatprep.mubr.bf16.mxu0 0
    %849 = vmatmul.mubr.bf16.gmra.mrb[0].mxu0 %v718
    %v850 = vpop.f32.mrb[0].mxu0
    %v851 = vadd.f32 0.0, %v850
    %v852 = vpop.f32.mrb[0].mxu0
    %v853 = vpop.f32.mrb[0].mxu0
    %v854 = vadd.f32 0.0, %v853
    %v855 = vpop.f32.mrb[0].mxu0
    %856 = vmatprep.mubr.bf16.mxu0 0
    %857 = vmatmul.mubr.bf16.gmra.mrb[0].mxu0 %v720
    %v858 = vpop.f32.mrb[0].mxu0
    %v859 = vadd.f32 0.0, %v858
    %v860 = vpop.f32.mrb[0].mxu0
    %v861 = vpop.f32.mrb[0].mxu0
    %v862 = vadd.f32 0.0, %v861
    %v863 = vpop.f32.mrb[0].mxu0
    %864 = vmatprep.mubr.bf16.mxu0 0
    %865 = vmatmul.mubr.bf16.gmra.mrb[0].mxu0 %v722
    %v866 = vpop.f32.mrb[0].mxu0
    %v867 = vadd.f32 0.0, %v866
    %v868 = vpop.f32.mrb[0].mxu0
    %v869 = vpop.f32.mrb[0].mxu0
    %v870 = vadd.f32 0.0, %v869
    %v871 = vpop.f32.mrb[0].mxu0
    %872 = vmatprep.mubr.bf16.mxu0 0
    %873 = vmatmul.mubr.bf16.gmra.mrb[0].mxu0 %v724
    %v874 = vpop.f32.mrb[0].mxu0
    %v875 = vadd.f32 0.0, %v874
    %v876 = vpop.f32.mrb[0].mxu0
    %v877 = vpop.f32.mrb[0].mxu0
    %v878 = vadd.f32 0.0, %v877
    %v879 = vpop.f32.mrb[0].mxu0
    %880 = vmatprep.mubr.bf16.mxu0 0
    %881 = vmatmul.mubr.bf16.gmra.mrb[0].mxu0 %v726
    %v882 = vpop.f32.mrb[0].mxu0
    %v883 = vadd.f32 0.0, %v882
    %v884 = vpop.f32.mrb[0].mxu0
    %v885 = vpop.f32.mrb[0].mxu0
    %v886 = vadd.f32 0.0, %v885
    %v887 = vpop.f32.mrb[0].mxu0
    %888 = vdwg.mxu0
    %v889 = vld [vmem:[#allocation2] sm:$0xff]
    %v890 = vld [vmem:[#allocation2 + $0x8] sm:$0xff]
    %v891 = vld [vmem:[#allocation2 + $0x10] sm:$0xff]
    %v892 = vld [vmem:[#allocation2 + $0x18] sm:$0xff]
    %v893 = vld [vmem:[#allocation2 + $0x20] sm:$0xff]
    %v894 = vld [vmem:[#allocation2 + $0x28] sm:$0xff]
    %v895 = vld [vmem:[#allocation2 + $0x30] sm:$0xff]
    %v896 = vld [vmem:[#allocation2 + $0x38] sm:$0xff]
    %v897 = vld [vmem:[#allocation2 + $0x40] sm:$0xff]
    %v898 = vld [vmem:[#allocation2 + $0x48] sm:$0xff]
    %v899 = vld [vmem:[#allocation2 + $0x50] sm:$0xff]
    %v900 = vld [vmem:[#allocation2 + $0x58] sm:$0xff]
    %v901 = vld [vmem:[#allocation2 + $0x60] sm:$0xff]
    %v902 = vld [vmem:[#allocation2 + $0x68] sm:$0xff]
    %v903 = vld [vmem:[#allocation2 + $0x70] sm:$0xff]
    %v904 = vld [vmem:[#allocation2 + $0x78] sm:$0xff]
    %v905 = vld [vmem:[#allocation2 + $0x80] sm:$0xff]
    %v906 = vld [vmem:[#allocation2 + $0x88] sm:$0xff]
    %v907 = vadd.f32 %v889, %v819
    %v908 = vadd.f32 %v890, %v822
    %v909 = vadd.f32 %v891, %v827
    %v910 = vadd.f32 %v892, %v830
    %v911 = vadd.f32 %v893, %v835
    %v912 = vadd.f32 %v894, %v838
    %v913 = vadd.f32 %v895, %v843
    %v914 = vadd.f32 %v896, %v846
    %v915 = vadd.f32 %v897, %v851
    %v916 = vadd.f32 %v898, %v854
    %v917 = vadd.f32 %v899, %v859
    %v918 = vadd.f32 %v900, %v862
    %v919 = vadd.f32 %v901, %v867
    %v920 = vadd.f32 %v902, %v870
    %v921 = vadd.f32 %v903, %v875
    %v922 = vadd.f32 %v904, %v878
    %v923 = vadd.f32 %v905, %v883
    %v924 = vadd.f32 %v906, %v886
    %925 = vst [vmem:[#allocation2] sm:$0xff] %v907
    %926 = vst [vmem:[#allocation2 + $0x8] sm:$0xff] %v908
    %927 = vst [vmem:[#allocation2 + $0x10] sm:$0xff] %v909
    %928 = vst [vmem:[#allocation2 + $0x18] sm:$0xff] %v910
    %929 = vst [vmem:[#allocation2 + $0x20] sm:$0xff] %v911
    %930 = vst [vmem:[#allocation2 + $0x28] sm:$0xff] %v912
    %931 = vst [vmem:[#allocation2 + $0x30] sm:$0xff] %v913
    %932 = vst [vmem:[#allocation2 + $0x38] sm:$0xff] %v914
    %933 = vst [vmem:[#allocation2 + $0x40] sm:$0xff] %v915
    %934 = vst [vmem:[#allocation2 + $0x48] sm:$0xff] %v916
    %935 = vst [vmem:[#allocation2 + $0x50] sm:$0xff] %v917
    %936 = vst [vmem:[#allocation2 + $0x58] sm:$0xff] %v918
    %937 = vst [vmem:[#allocation2 + $0x60] sm:$0xff] %v919
    %938 = vst [vmem:[#allocation2 + $0x68] sm:$0xff] %v920
    %939 = vst [vmem:[#allocation2 + $0x70] sm:$0xff] %v921
    %940 = vst [vmem:[#allocation2 + $0x78] sm:$0xff] %v922
    %941 = vst [vmem:[#allocation2 + $0x80] sm:$0xff] %v923
    %942 = vst [vmem:[#allocation2 + $0x88] sm:$0xff] %v924
    %v943 = vld [vmem:[#allocation3 + $0xc] sm:$0xf]
    %v944 = vld [vmem:[#allocation3 + $0x10] sm:$0xf]
    %v945 = vld [vmem:[#allocation3 + $0x14] sm:$0xf]
    %v946 = vld [vmem:[#allocation3 + $0x18] sm:$0xf]
    %v947 = vld [vmem:[#allocation3 + $0x1c] sm:$0xf]
    %v948 = vld [vmem:[#allocation3 + $0x20] sm:$0xf]
    %v949 = vld [vmem:[#allocation3 + $0x24] sm:$0xf]
    %v950 = vld [vmem:[#allocation3 + $0x28] sm:$0xf]
    %v951 = vld [vmem:[#allocation3 + $0x2c] sm:$0xf]
    %v952 = vld [vmem:[#allocation3 + $0x30] sm:$0xf]
    %v953 = vld [vmem:[#allocation3 + $0x34] sm:$0xf]
    %v954 = vld [vmem:[#allocation3 + $0x38] sm:$0xf]
    %v955 = vld [vmem:[#allocation3 + $0x3c] sm:$0xf]
    %v956 = vld [vmem:[#allocation3 + $0x40] sm:$0xf]
    %v957 = vld [vmem:[#allocation3 + $0x44] sm:$0xf]
    %v958 = vld [vmem:[#allocation3 + $0x48] sm:$0xf]
    %v959 = vld [vmem:[#allocation3 + $0x4c] sm:$0xf]
    %v960 = vld [vmem:[#allocation3 + $0x50] sm:$0xf]
    %s961 = scalar_lea.vmem [#allocation6], 192
    %v962 = vld [vmem:[%s961] sm:$0xf]
    %v963 = vld [vmem:[%s961 + $0x4] sm:$0xf]
    %v964 = vld [vmem:[%s961 + $0x8] sm:$0xf]
    %v965 = vld [vmem:[%s961 + $0xc] sm:$0xf]
    %v966 = vld [vmem:[%s961 + $0x10] sm:$0xf]
    %v967 = vld [vmem:[%s961 + $0x14] sm:$0xf]
    %v968 = vld [vmem:[%s961 + $0x18] sm:$0xf]
    %v969 = vld [vmem:[%s961 + $0x1c] sm:$0xf]
    %v970 = vld [vmem:[%s961 + $0x20] sm:$0xf]
    %v971 = vld [vmem:[%s961 + $0x24] sm:$0xf]
    %v972 = vld [vmem:[%s961 + $0x28] sm:$0xf]
    %v973 = vld [vmem:[%s961 + $0x2c] sm:$0xf]
    %v974 = vld [vmem:[%s961 + $0x30] sm:$0xf]
    %v975 = vld [vmem:[%s961 + $0x34] sm:$0xf]
    %v976 = vld [vmem:[%s961 + $0x38] sm:$0xf]
    %v977 = vld [vmem:[%s961 + $0x3c] sm:$0xf]
    %v996 = vunpack.c.l.b16 %v943
    %v997 = vunpack.c.l.b16 %v944
    %v998 = vunpack.c.l.b16 %v945
    %v999 = vunpack.c.l.b16 %v946
    %v1000 = vunpack.c.l.b16 %v947
    %v1001 = vunpack.c.l.b16 %v948
    %v1002 = vunpack.c.l.b16 %v949
    %v1003 = vunpack.c.l.b16 %v950
    %v1004 = vunpack.c.l.b16 %v951
    %v1005 = vunpack.c.l.b16 %v952
    %v1006 = vunpack.c.l.b16 %v953
    %v1007 = vunpack.c.l.b16 %v954
    %v1008 = vunpack.c.l.b16 %v955
    %v1009 = vunpack.c.l.b16 %v956
    %v1010 = vunpack.c.l.b16 %v957
    %v1011 = vunpack.c.l.b16 %v958
    %v1012 = vunpack.c.l.b16 %v959
    %v1013 = vunpack.c.l.b16 %v960
    %v1014 = vpack.c.b16 %v997, %v996
    %v1015 = vpack.c.b16 %v999, %v998
    %v1016 = vpack.c.b16 %v1001, %v1000
    %v1017 = vpack.c.b16 %v1003, %v1002
    %v1018 = vpack.c.b16 %v1005, %v1004
    %v1019 = vpack.c.b16 %v1007, %v1006
    %v1020 = vpack.c.b16 %v1009, %v1008
    %v1021 = vpack.c.b16 %v1011, %v1010
    %v1022 = vpack.c.b16 %v1013, %v1012
    %v1048 = vunpack.c.l.b16 %v962
    %v1049 = vunpack.c.l.b16 %v963
    %v1050 = vunpack.c.l.b16 %v964
    %v1051 = vunpack.c.l.b16 %v965
    %v1052 = vunpack.c.l.b16 %v966
    %v1053 = vunpack.c.l.b16 %v967
    %v1054 = vunpack.c.l.b16 %v968
    %v1055 = vunpack.c.l.b16 %v969
    %v1056 = vunpack.c.l.b16 %v970
    %v1057 = vunpack.c.l.b16 %v971
    %v1058 = vunpack.c.l.b16 %v972
    %v1059 = vunpack.c.l.b16 %v973
    %v1060 = vunpack.c.l.b16 %v974
    %v1061 = vunpack.c.l.b16 %v975
    %v1062 = vunpack.c.l.b16 %v976
    %v1063 = vunpack.c.l.b16 %v977
    %v1064 = vpack.c.b16 %v1049, %v1048
    %v1065 = vpack.c.b16 %v1051, %v1050
    %v1066 = vpack.c.b16 %v1053, %v1052
    %v1067 = vpack.c.b16 %v1055, %v1054
    %v1068 = vpack.c.b16 %v1057, %v1056
    %v1069 = vpack.c.b16 %v1059, %v1058
    %v1070 = vpack.c.b16 %v1061, %v1060
    %v1071 = vpack.c.b16 %v1063, %v1062
    %1080 = vmatprep.subr.bf16.mxu0 0
    %1081 = vmatpush1.bf16.msra.mxu0 %v1064
    %1082 = vmatprep.subr.bf16.mxu0 0
    %1083 = vmatpush1.bf16.msra.mxu0 %v1065
    %1084 = vmatprep.subr.bf16.mxu0 0
    %1085 = vmatpush1.bf16.msra.mxu0 %v1066
    %1086 = vmatprep.subr.bf16.mxu0 0
    %1087 = vmatpush1.bf16.msra.mxu0 %v1067
    %1088 = vmatprep.subr.bf16.mxu0 0
    %1089 = vmatpush1.bf16.msra.mxu0 %v1068
    %1090 = vmatprep.subr.bf16.mxu0 0
    %1091 = vmatpush1.bf16.msra.mxu0 %v1069
    %1092 = vmatprep.subr.bf16.mxu0 0
    %1093 = vmatpush1.bf16.msra.mxu0 %v1070
    %1094 = vmatprep.subr.bf16.mxu0 0
    %1095 = vmatpush1.bf16.msra.mxu0 %v1071
    %1096 = vmatprep.subr.bf16.mxu0 0
    %1097 = vmatpush1.bf16.msra.mxu0 0
    %1098 = vmatprep.subr.bf16.mxu0 0
    %1099 = vmatpush1.bf16.msra.mxu0 0
    %1100 = vmatprep.subr.bf16.mxu0 0
    %1101 = vmatpush1.bf16.msra.mxu0 0
    %1102 = vmatprep.subr.bf16.mxu0 0
    %1103 = vmatpush1.bf16.msra.mxu0 0
    %1104 = vmatprep.subr.bf16.mxu0 0
    %1105 = vmatpush1.bf16.msra.mxu0 0
    %1106 = vmatprep.subr.bf16.mxu0 0
    %1107 = vmatpush1.bf16.msra.mxu0 0
    %1108 = vmatprep.subr.bf16.mxu0 0
    %1109 = vmatpush1.bf16.msra.mxu0 0
    %1110 = vmatprep.subr.bf16.mxu0 0
    %1111 = vmatpush1.bf16.msra.mxu0 0
    %1112 = vmatprep.mubr.bf16.mxu0 0
    %1113 = vmatmul.mubr.bf16.gmra.mrb[0].mxu0 %v1014
    %v1114 = vpop.f32.mrb[0].mxu0
    %v1115 = vadd.f32 0.0, %v1114
    %v1116 = vpop.f32.mrb[0].mxu0
    %v1117 = vpop.f32.mrb[0].mxu0
    %v1118 = vadd.f32 0.0, %v1117
    %v1119 = vpop.f32.mrb[0].mxu0
    %1120 = vmatprep.mubr.bf16.mxu0 0
    %1121 = vmatmul.mubr.bf16.gmra.mrb[0].mxu0 %v1015
    %v1122 = vpop.f32.mrb[0].mxu0
    %v1123 = vadd.f32 0.0, %v1122
    %v1124 = vpop.f32.mrb[0].mxu0
    %v1125 = vpop.f32.mrb[0].mxu0
    %v1126 = vadd.f32 0.0, %v1125
    %v1127 = vpop.f32.mrb[0].mxu0
    %1128 = vmatprep.mubr.bf16.mxu0 0
    %1129 = vmatmul.mubr.bf16.gmra.mrb[0].mxu0 %v1016
    %v1130 = vpop.f32.mrb[0].mxu0
    %v1131 = vadd.f32 0.0, %v1130
    %v1132 = vpop.f32.mrb[0].mxu0
    %v1133 = vpop.f32.mrb[0].mxu0
    %v1134 = vadd.f32 0.0, %v1133
    %v1135 = vpop.f32.mrb[0].mxu0
    %1136 = vmatprep.mubr.bf16.mxu0 0
    %1137 = vmatmul.mubr.bf16.gmra.mrb[0].mxu0 %v1017
    %v1138 = vpop.f32.mrb[0].mxu0
    %v1139 = vadd.f32 0.0, %v1138
    %v1140 = vpop.f32.mrb[0].mxu0
    %v1141 = vpop.f32.mrb[0].mxu0
    %v1142 = vadd.f32 0.0, %v1141
    %v1143 = vpop.f32.mrb[0].mxu0
    %1144 = vmatprep.mubr.bf16.mxu0 0
    %1145 = vmatmul.mubr.bf16.gmra.mrb[0].mxu0 %v1018
    %v1146 = vpop.f32.mrb[0].mxu0
    %v1147 = vadd.f32 0.0, %v1146
    %v1148 = vpop.f32.mrb[0].mxu0
    %v1149 = vpop.f32.mrb[0].mxu0
    %v1150 = vadd.f32 0.0, %v1149
    %v1151 = vpop.f32.mrb[0].mxu0
    %1152 = vmatprep.mubr.bf16.mxu0 0
    %1153 = vmatmul.mubr.bf16.gmra.mrb[0].mxu0 %v1019
    %v1154 = vpop.f32.mrb[0].mxu0
    %v1155 = vadd.f32 0.0, %v1154
    %v1156 = vpop.f32.mrb[0].mxu0
    %v1157 = vpop.f32.mrb[0].mxu0
    %v1158 = vadd.f32 0.0, %v1157
    %v1159 = vpop.f32.mrb[0].mxu0
    %1160 = vmatprep.mubr.bf16.mxu0 0
    %1161 = vmatmul.mubr.bf16.gmra.mrb[0].mxu0 %v1020
    %v1162 = vpop.f32.mrb[0].mxu0
    %v1163 = vadd.f32 0.0, %v1162
    %v1164 = vpop.f32.mrb[0].mxu0
    %v1165 = vpop.f32.mrb[0].mxu0
    %v1166 = vadd.f32 0.0, %v1165
    %v1167 = vpop.f32.mrb[0].mxu0
    %1168 = vmatprep.mubr.bf16.mxu0 0
    %1169 = vmatmul.mubr.bf16.gmra.mrb[0].mxu0 %v1021
    %v1170 = vpop.f32.mrb[0].mxu0
    %v1171 = vadd.f32 0.0, %v1170
    %v1172 = vpop.f32.mrb[0].mxu0
    %v1173 = vpop.f32.mrb[0].mxu0
    %v1174 = vadd.f32 0.0, %v1173
    %v1175 = vpop.f32.mrb[0].mxu0
    %1176 = vmatprep.mubr.bf16.mxu0 0
    %1177 = vmatmul.mubr.bf16.gmra.mrb[0].mxu0 %v1022
    %v1178 = vpop.f32.mrb[0].mxu0
    %v1179 = vadd.f32 0.0, %v1178
    %v1180 = vpop.f32.mrb[0].mxu0
    %v1181 = vpop.f32.mrb[0].mxu0
    %v1182 = vadd.f32 0.0, %v1181
    %v1183 = vpop.f32.mrb[0].mxu0
    %1184 = vdwg.mxu0
    %v1185 = vld [vmem:[#allocation2] sm:$0xff]
    %v1186 = vld [vmem:[#allocation2 + $0x8] sm:$0xff]
    %v1187 = vld [vmem:[#allocation2 + $0x10] sm:$0xff]
    %v1188 = vld [vmem:[#allocation2 + $0x18] sm:$0xff]
    %v1189 = vld [vmem:[#allocation2 + $0x20] sm:$0xff]
    %v1190 = vld [vmem:[#allocation2 + $0x28] sm:$0xff]
    %v1191 = vld [vmem:[#allocation2 + $0x30] sm:$0xff]
    %v1192 = vld [vmem:[#allocation2 + $0x38] sm:$0xff]
    %v1193 = vld [vmem:[#allocation2 + $0x40] sm:$0xff]
    %v1194 = vld [vmem:[#allocation2 + $0x48] sm:$0xff]
    %v1195 = vld [vmem:[#allocation2 + $0x50] sm:$0xff]
    %v1196 = vld [vmem:[#allocation2 + $0x58] sm:$0xff]
    %v1197 = vld [vmem:[#allocation2 + $0x60] sm:$0xff]
    %v1198 = vld [vmem:[#allocation2 + $0x68] sm:$0xff]
    %v1199 = vld [vmem:[#allocation2 + $0x70] sm:$0xff]
    %v1200 = vld [vmem:[#allocation2 + $0x78] sm:$0xff]
    %v1201 = vld [vmem:[#allocation2 + $0x80] sm:$0xff]
    %v1202 = vld [vmem:[#allocation2 + $0x88] sm:$0xff]
    %v1203 = vadd.f32 %v1185, %v1115
    %v1204 = vadd.f32 %v1186, %v1118
    %v1205 = vadd.f32 %v1187, %v1123
    %v1206 = vadd.f32 %v1188, %v1126
    %v1207 = vadd.f32 %v1189, %v1131
    %v1208 = vadd.f32 %v1190, %v1134
    %v1209 = vadd.f32 %v1191, %v1139
    %v1210 = vadd.f32 %v1192, %v1142
    %v1211 = vadd.f32 %v1193, %v1147
    %v1212 = vadd.f32 %v1194, %v1150
    %v1213 = vadd.f32 %v1195, %v1155
    %v1214 = vadd.f32 %v1196, %v1158
    %v1215 = vadd.f32 %v1197, %v1163
    %v1216 = vadd.f32 %v1198, %v1166
    %v1217 = vadd.f32 %v1199, %v1171
    %v1218 = vadd.f32 %v1200, %v1174
    %v1219 = vadd.f32 %v1201, %v1179
    %v1220 = vadd.f32 %v1202, %v1182
    %1221 = vst [vmem:[#allocation2] sm:$0xff] %v1203
    %1222 = vst [vmem:[#allocation2 + $0x8] sm:$0xff] %v1204
    %1223 = vst [vmem:[#allocation2 + $0x10] sm:$0xff] %v1205
    %1224 = vst [vmem:[#allocation2 + $0x18] sm:$0xff] %v1206
    %1225 = vst [vmem:[#allocation2 + $0x20] sm:$0xff] %v1207
    %1226 = vst [vmem:[#allocation2 + $0x28] sm:$0xff] %v1208
    %1227 = vst [vmem:[#allocation2 + $0x30] sm:$0xff] %v1209
    %1228 = vst [vmem:[#allocation2 + $0x38] sm:$0xff] %v1210
    %1229 = vst [vmem:[#allocation2 + $0x40] sm:$0xff] %v1211
    %1230 = vst [vmem:[#allocation2 + $0x48] sm:$0xff] %v1212
    %1231 = vst [vmem:[#allocation2 + $0x50] sm:$0xff] %v1213
    %1232 = vst [vmem:[#allocation2 + $0x58] sm:$0xff] %v1214
    %1233 = vst [vmem:[#allocation2 + $0x60] sm:$0xff] %v1215
    %1234 = vst [vmem:[#allocation2 + $0x68] sm:$0xff] %v1216
    %1235 = vst [vmem:[#allocation2 + $0x70] sm:$0xff] %v1217
    %1236 = vst [vmem:[#allocation2 + $0x78] sm:$0xff] %v1218
    %1237 = vst [vmem:[#allocation2 + $0x80] sm:$0xff] %v1219
    %1238 = vst [vmem:[#allocation2 + $0x88] sm:$0xff] %v1220
    %v1239 = vld [vmem:[#allocation3 + $0xc] sm:$0xe]
    %v1240 = vld [vmem:[#allocation3 + $0x10] sm:$0xf]
    %v1241 = vld [vmem:[#allocation3 + $0x14] sm:$0xf]
    %v1242 = vld [vmem:[#allocation3 + $0x18] sm:$0xf]
    %v1243 = vld [vmem:[#allocation3 + $0x1c] sm:$0xf]
    %v1244 = vld [vmem:[#allocation3 + $0x20] sm:$0xf]
    %v1245 = vld [vmem:[#allocation3 + $0x24] sm:$0xf]
    %v1246 = vld [vmem:[#allocation3 + $0x28] sm:$0xf]
    %v1247 = vld [vmem:[#allocation3 + $0x2c] sm:$0xf]
    %v1248 = vld [vmem:[#allocation3 + $0x30] sm:$0xf]
    %v1249 = vld [vmem:[#allocation3 + $0x34] sm:$0xf]
    %v1250 = vld [vmem:[#allocation3 + $0x38] sm:$0xf]
    %v1251 = vld [vmem:[#allocation3 + $0x3c] sm:$0xf]
    %v1252 = vld [vmem:[#allocation3 + $0x40] sm:$0xf]
    %v1253 = vld [vmem:[#allocation3 + $0x44] sm:$0xf]
    %v1254 = vld [vmem:[#allocation3 + $0x48] sm:$0xf]
    %v1255 = vld [vmem:[#allocation3 + $0x4c] sm:$0xf]
    %v1256 = vld [vmem:[#allocation3 + $0x50] sm:$0xf]
    %v1257 = vld [vmem:[#allocation3 + $0x54] sm:$0x1]
    %s1258 = scalar_lea.vmem [#allocation6], 256
    %v1259 = vld [vmem:[%s1258] sm:$0xf]
    %v1260 = vld [vmem:[%s1258 + $0x4] sm:$0xf]
    %v1261 = vld [vmem:[%s1258 + $0x8] sm:$0xf]
    %v1262 = vld [vmem:[%s1258 + $0xc] sm:$0xf]
    %v1263 = vld [vmem:[%s1258 + $0x10] sm:$0xf]
    %v1264 = vld [vmem:[%s1258 + $0x14] sm:$0xf]
    %v1265 = vld [vmem:[%s1258 + $0x18] sm:$0xf]
    %v1266 = vld [vmem:[%s1258 + $0x1c] sm:$0xf]
    %v1267 = vld [vmem:[%s1258 + $0x20] sm:$0xf]
    %v1268 = vld [vmem:[%s1258 + $0x24] sm:$0xf]
    %v1269 = vld [vmem:[%s1258 + $0x28] sm:$0xf]
    %v1270 = vld [vmem:[%s1258 + $0x2c] sm:$0xf]
    %v1271 = vld [vmem:[%s1258 + $0x30] sm:$0xf]
    %v1272 = vld [vmem:[%s1258 + $0x34] sm:$0xf]
    %v1273 = vld [vmem:[%s1258 + $0x38] sm:$0xf]
    %v1274 = vld [vmem:[%s1258 + $0x3c] sm:$0xf]
    %v1294 = vunpack.c.l.b16 %v1239
    %v1295 = vunpack.c.l.b16 %v1240
    %v1296 = vunpack.c.l.b16 %v1241
    %v1297 = vunpack.c.l.b16 %v1242
    %v1298 = vunpack.c.l.b16 %v1243
    %v1299 = vunpack.c.l.b16 %v1244
    %v1300 = vunpack.c.l.b16 %v1245
    %v1301 = vunpack.c.l.b16 %v1246
    %v1302 = vunpack.c.l.b16 %v1247
    %v1303 = vunpack.c.l.b16 %v1248
    %v1304 = vunpack.c.l.b16 %v1249
    %v1305 = vunpack.c.l.b16 %v1250
    %v1306 = vunpack.c.l.b16 %v1251
    %v1307 = vunpack.c.l.b16 %v1252
    %v1308 = vunpack.c.l.b16 %v1253
    %v1309 = vunpack.c.l.b16 %v1254
    %v1310 = vunpack.c.l.b16 %v1255
    %v1311 = vunpack.c.l.b16 %v1256
    %v1312 = vunpack.c.l.b16 %v1257
    %v1313 = vpack.c.b16 %v1295, %v1294
    %v1314 = vpack.c.b16 %v1297, %v1296
    %v1315 = vpack.c.b16 %v1299, %v1298
    %v1316 = vpack.c.b16 %v1301, %v1300
    %v1317 = vpack.c.b16 %v1303, %v1302
    %v1318 = vpack.c.b16 %v1305, %v1304
    %v1319 = vpack.c.b16 %v1307, %v1306
    %v1320 = vpack.c.b16 %v1309, %v1308
    %v1321 = vpack.c.b16 %v1311, %v1310
    %v1322 = vpack.c.b16 %v1312, %v1312
    %v1323 = vrot.slane %v1313, 1
    %v1324 = vrot.slane %v1314, 1
    %v1325 = vsel %vm387, %v1323, %v1324
    %v1326 = vrot.slane %v1315, 1
    %v1327 = vsel %vm387, %v1324, %v1326
    %v1328 = vrot.slane %v1316, 1
    %v1329 = vsel %vm387, %v1326, %v1328
    %v1330 = vrot.slane %v1317, 1
    %v1331 = vsel %vm387, %v1328, %v1330
    %v1332 = vrot.slane %v1318, 1
    %v1333 = vsel %vm387, %v1330, %v1332
    %v1334 = vrot.slane %v1319, 1
    %v1335 = vsel %vm387, %v1332, %v1334
    %v1336 = vrot.slane %v1320, 1
    %v1337 = vsel %vm387, %v1334, %v1336
    %v1338 = vrot.slane %v1321, 1
    %v1339 = vsel %vm387, %v1336, %v1338
    %v1340 = vrot.slane %v1322, 1
    %v1341 = vsel %vm387, %v1338, %v1340
    %v1367 = vunpack.c.l.b16 %v1259
    %v1368 = vunpack.c.l.b16 %v1260
    %v1369 = vunpack.c.l.b16 %v1261
    %v1370 = vunpack.c.l.b16 %v1262
    %v1371 = vunpack.c.l.b16 %v1263
    %v1372 = vunpack.c.l.b16 %v1264
    %v1373 = vunpack.c.l.b16 %v1265
    %v1374 = vunpack.c.l.b16 %v1266
    %v1375 = vunpack.c.l.b16 %v1267
    %v1376 = vunpack.c.l.b16 %v1268
    %v1377 = vunpack.c.l.b16 %v1269
    %v1378 = vunpack.c.l.b16 %v1270
    %v1379 = vunpack.c.l.b16 %v1271
    %v1380 = vunpack.c.l.b16 %v1272
    %v1381 = vunpack.c.l.b16 %v1273
    %v1382 = vunpack.c.l.b16 %v1274
    %v1383 = vpack.c.b16 %v1368, %v1367
    %v1384 = vpack.c.b16 %v1370, %v1369
    %v1385 = vpack.c.b16 %v1372, %v1371
    %v1386 = vpack.c.b16 %v1374, %v1373
    %v1387 = vpack.c.b16 %v1376, %v1375
    %v1388 = vpack.c.b16 %v1378, %v1377
    %v1389 = vpack.c.b16 %v1380, %v1379
    %v1390 = vpack.c.b16 %v1382, %v1381
    %1399 = vmatprep.subr.bf16.mxu0 0
    %1400 = vmatpush1.bf16.msra.mxu0 %v1383
    %1401 = vmatprep.subr.bf16.mxu0 0
    %1402 = vmatpush1.bf16.msra.mxu0 %v1384
    %1403 = vmatprep.subr.bf16.mxu0 0
    %1404 = vmatpush1.bf16.msra.mxu0 %v1385
    %1405 = vmatprep.subr.bf16.mxu0 0
    %1406 = vmatpush1.bf16.msra.mxu0 %v1386
    %1407 = vmatprep.subr.bf16.mxu0 0
    %1408 = vmatpush1.bf16.msra.mxu0 %v1387
    %1409 = vmatprep.subr.bf16.mxu0 0
    %1410 = vmatpush1.bf16.msra.mxu0 %v1388
    %1411 = vmatprep.subr.bf16.mxu0 0
    %1412 = vmatpush1.bf16.msra.mxu0 %v1389
    %1413 = vmatprep.subr.bf16.mxu0 0
    %1414 = vmatpush1.bf16.msra.mxu0 %v1390
    %1415 = vmatprep.subr.bf16.mxu0 0
    %1416 = vmatpush1.bf16.msra.mxu0 0
    %1417 = vmatprep.subr.bf16.mxu0 0
    %1418 = vmatpush1.bf16.msra.mxu0 0
    %1419 = vmatprep.subr.bf16.mxu0 0
    %1420 = vmatpush1.bf16.msra.mxu0 0
    %1421 = vmatprep.subr.bf16.mxu0 0
    %1422 = vmatpush1.bf16.msra.mxu0 0
    %1423 = vmatprep.subr.bf16.mxu0 0
    %1424 = vmatpush1.bf16.msra.mxu0 0
    %1425 = vmatprep.subr.bf16.mxu0 0
    %1426 = vmatpush1.bf16.msra.mxu0 0
    %1427 = vmatprep.subr.bf16.mxu0 0
    %1428 = vmatpush1.bf16.msra.mxu0 0
    %1429 = vmatprep.subr.bf16.mxu0 0
    %1430 = vmatpush1.bf16.msra.mxu0 0
    %1431 = vmatprep.mubr.bf16.mxu0 0
    %1432 = vmatmul.mubr.bf16.gmra.mrb[0].mxu0 %v1325
    %v1433 = vpop.f32.mrb[0].mxu0
    %v1434 = vadd.f32 0.0, %v1433
    %v1435 = vpop.f32.mrb[0].mxu0
    %v1436 = vpop.f32.mrb[0].mxu0
    %v1437 = vadd.f32 0.0, %v1436
    %v1438 = vpop.f32.mrb[0].mxu0
    %1439 = vmatprep.mubr.bf16.mxu0 0
    %1440 = vmatmul.mubr.bf16.gmra.mrb[0].mxu0 %v1327
    %v1441 = vpop.f32.mrb[0].mxu0
    %v1442 = vadd.f32 0.0, %v1441
    %v1443 = vpop.f32.mrb[0].mxu0
    %v1444 = vpop.f32.mrb[0].mxu0
    %v1445 = vadd.f32 0.0, %v1444
    %v1446 = vpop.f32.mrb[0].mxu0
    %1447 = vmatprep.mubr.bf16.mxu0 0
    %1448 = vmatmul.mubr.bf16.gmra.mrb[0].mxu0 %v1329
    %v1449 = vpop.f32.mrb[0].mxu0
    %v1450 = vadd.f32 0.0, %v1449
    %v1451 = vpop.f32.mrb[0].mxu0
    %v1452 = vpop.f32.mrb[0].mxu0
    %v1453 = vadd.f32 0.0, %v1452
    %v1454 = vpop.f32.mrb[0].mxu0
    %1455 = vmatprep.mubr.bf16.mxu0 0
    %1456 = vmatmul.mubr.bf16.gmra.mrb[0].mxu0 %v1331
    %v1457 = vpop.f32.mrb[0].mxu0
    %v1458 = vadd.f32 0.0, %v1457
    %v1459 = vpop.f32.mrb[0].mxu0
    %v1460 = vpop.f32.mrb[0].mxu0
    %v1461 = vadd.f32 0.0, %v1460
    %v1462 = vpop.f32.mrb[0].mxu0
    %1463 = vmatprep.mubr.bf16.mxu0 0
    %1464 = vmatmul.mubr.bf16.gmra.mrb[0].mxu0 %v1333
    %v1465 = vpop.f32.mrb[0].mxu0
    %v1466 = vadd.f32 0.0, %v1465
    %v1467 = vpop.f32.mrb[0].mxu0
    %v1468 = vpop.f32.mrb[0].mxu0
    %v1469 = vadd.f32 0.0, %v1468
    %v1470 = vpop.f32.mrb[0].mxu0
    %1471 = vmatprep.mubr.bf16.mxu0 0
    %1472 = vmatmul.mubr.bf16.gmra.mrb[0].mxu0 %v1335
    %v1473 = vpop.f32.mrb[0].mxu0
    %v1474 = vadd.f32 0.0, %v1473
    %v1475 = vpop.f32.mrb[0].mxu0
    %v1476 = vpop.f32.mrb[0].mxu0
    %v1477 = vadd.f32 0.0, %v1476
    %v1478 = vpop.f32.mrb[0].mxu0
    %1479 = vmatprep.mubr.bf16.mxu0 0
    %1480 = vmatmul.mubr.bf16.gmra.mrb[0].mxu0 %v1337
    %v1481 = vpop.f32.mrb[0].mxu0
    %v1482 = vadd.f32 0.0, %v1481
    %v1483 = vpop.f32.mrb[0].mxu0
    %v1484 = vpop.f32.mrb[0].mxu0
    %v1485 = vadd.f32 0.0, %v1484
    %v1486 = vpop.f32.mrb[0].mxu0
    %1487 = vmatprep.mubr.bf16.mxu0 0
    %1488 = vmatmul.mubr.bf16.gmra.mrb[0].mxu0 %v1339
    %v1489 = vpop.f32.mrb[0].mxu0
    %v1490 = vadd.f32 0.0, %v1489
    %v1491 = vpop.f32.mrb[0].mxu0
    %v1492 = vpop.f32.mrb[0].mxu0
    %v1493 = vadd.f32 0.0, %v1492
    %v1494 = vpop.f32.mrb[0].mxu0
    %1495 = vmatprep.mubr.bf16.mxu0 0
    %1496 = vmatmul.mubr.bf16.gmra.mrb[0].mxu0 %v1341
    %v1497 = vpop.f32.mrb[0].mxu0
    %v1498 = vadd.f32 0.0, %v1497
    %v1499 = vpop.f32.mrb[0].mxu0
    %v1500 = vpop.f32.mrb[0].mxu0
    %v1501 = vadd.f32 0.0, %v1500
    %v1502 = vpop.f32.mrb[0].mxu0
    %1503 = vdwg.mxu0
    %v1504 = vld [vmem:[#allocation2] sm:$0xff]
    %v1505 = vld [vmem:[#allocation2 + $0x8] sm:$0xff]
    %v1506 = vld [vmem:[#allocation2 + $0x10] sm:$0xff]
    %v1507 = vld [vmem:[#allocation2 + $0x18] sm:$0xff]
    %v1508 = vld [vmem:[#allocation2 + $0x20] sm:$0xff]
    %v1509 = vld [vmem:[#allocation2 + $0x28] sm:$0xff]
    %v1510 = vld [vmem:[#allocation2 + $0x30] sm:$0xff]
    %v1511 = vld [vmem:[#allocation2 + $0x38] sm:$0xff]
    %v1512 = vld [vmem:[#allocation2 + $0x40] sm:$0xff]
    %v1513 = vld [vmem:[#allocation2 + $0x48] sm:$0xff]
    %v1514 = vld [vmem:[#allocation2 + $0x50] sm:$0xff]
    %v1515 = vld [vmem:[#allocation2 + $0x58] sm:$0xff]
    %v1516 = vld [vmem:[#allocation2 + $0x60] sm:$0xff]
    %v1517 = vld [vmem:[#allocation2 + $0x68] sm:$0xff]
    %v1518 = vld [vmem:[#allocation2 + $0x70] sm:$0xff]
    %v1519 = vld [vmem:[#allocation2 + $0x78] sm:$0xff]
    %v1520 = vld [vmem:[#allocation2 + $0x80] sm:$0xff]
    %v1521 = vld [vmem:[#allocation2 + $0x88] sm:$0xff]
    %v1522 = vadd.f32 %v1504, %v1434
    %v1523 = vadd.f32 %v1505, %v1437
    %v1524 = vadd.f32 %v1506, %v1442
    %v1525 = vadd.f32 %v1507, %v1445
    %v1526 = vadd.f32 %v1508, %v1450
    %v1527 = vadd.f32 %v1509, %v1453
    %v1528 = vadd.f32 %v1510, %v1458
    %v1529 = vadd.f32 %v1511, %v1461
    %v1530 = vadd.f32 %v1512, %v1466
    %v1531 = vadd.f32 %v1513, %v1469
    %v1532 = vadd.f32 %v1514, %v1474
    %v1533 = vadd.f32 %v1515, %v1477
    %v1534 = vadd.f32 %v1516, %v1482
    %v1535 = vadd.f32 %v1517, %v1485
    %v1536 = vadd.f32 %v1518, %v1490
    %v1537 = vadd.f32 %v1519, %v1493
    %v1538 = vadd.f32 %v1520, %v1498
    %v1539 = vadd.f32 %v1521, %v1501
    %1540 = vst [vmem:[#allocation2] sm:$0xff] %v1522
    %1541 = vst [vmem:[#allocation2 + $0x8] sm:$0xff] %v1523
    %1542 = vst [vmem:[#allocation2 + $0x10] sm:$0xff] %v1524
    %1543 = vst [vmem:[#allocation2 + $0x18] sm:$0xff] %v1525
    %1544 = vst [vmem:[#allocation2 + $0x20] sm:$0xff] %v1526
    %1545 = vst [vmem:[#allocation2 + $0x28] sm:$0xff] %v1527
    %1546 = vst [vmem:[#allocation2 + $0x30] sm:$0xff] %v1528
    %1547 = vst [vmem:[#allocation2 + $0x38] sm:$0xff] %v1529
    %1548 = vst [vmem:[#allocation2 + $0x40] sm:$0xff] %v1530
    %1549 = vst [vmem:[#allocation2 + $0x48] sm:$0xff] %v1531
    %1550 = vst [vmem:[#allocation2 + $0x50] sm:$0xff] %v1532
    %1551 = vst [vmem:[#allocation2 + $0x58] sm:$0xff] %v1533
    %1552 = vst [vmem:[#allocation2 + $0x60] sm:$0xff] %v1534
    %1553 = vst [vmem:[#allocation2 + $0x68] sm:$0xff] %v1535
    %1554 = vst [vmem:[#allocation2 + $0x70] sm:$0xff] %v1536
    %1555 = vst [vmem:[#allocation2 + $0x78] sm:$0xff] %v1537
    %1556 = vst [vmem:[#allocation2 + $0x80] sm:$0xff] %v1538
    %1557 = vst [vmem:[#allocation2 + $0x88] sm:$0xff] %v1539
    %v1558 = vld [vmem:[#allocation3 + $0xc] sm:$0xc]
    %v1559 = vld [vmem:[#allocation3 + $0x10] sm:$0xf]
    %v1560 = vld [vmem:[#allocation3 + $0x14] sm:$0xf]
    %v1561 = vld [vmem:[#allocation3 + $0x18] sm:$0xf]
    %v1562 = vld [vmem:[#allocation3 + $0x1c] sm:$0xf]
    %v1563 = vld [vmem:[#allocation3 + $0x20] sm:$0xf]
    %v1564 = vld [vmem:[#allocation3 + $0x24] sm:$0xf]
    %v1565 = vld [vmem:[#allocation3 + $0x28] sm:$0xf]
    %v1566 = vld [vmem:[#allocation3 + $0x2c] sm:$0xf]
    %v1567 = vld [vmem:[#allocation3 + $0x30] sm:$0xf]
    %v1568 = vld [vmem:[#allocation3 + $0x34] sm:$0xf]
    %v1569 = vld [vmem:[#allocation3 + $0x38] sm:$0xf]
    %v1570 = vld [vmem:[#allocation3 + $0x3c] sm:$0xf]
    %v1571 = vld [vmem:[#allocation3 + $0x40] sm:$0xf]
    %v1572 = vld [vmem:[#allocation3 + $0x44] sm:$0xf]
    %v1573 = vld [vmem:[#allocation3 + $0x48] sm:$0xf]
    %v1574 = vld [vmem:[#allocation3 + $0x4c] sm:$0xf]
    %v1575 = vld [vmem:[#allocation3 + $0x50] sm:$0xf]
    %v1576 = vld [vmem:[#allocation3 + $0x54] sm:$0x3]
    %s1577 = scalar_lea.vmem [#allocation6], 320
    %v1578 = vld [vmem:[%s1577] sm:$0xf]
    %v1579 = vld [vmem:[%s1577 + $0x4] sm:$0xf]
    %v1580 = vld [vmem:[%s1577 + $0x8] sm:$0xf]
    %v1581 = vld [vmem:[%s1577 + $0xc] sm:$0xf]
    %v1582 = vld [vmem:[%s1577 + $0x10] sm:$0xf]
    %v1583 = vld [vmem:[%s1577 + $0x14] sm:$0xf]
    %v1584 = vld [vmem:[%s1577 + $0x18] sm:$0xf]
    %v1585 = vld [vmem:[%s1577 + $0x1c] sm:$0xf]
    %v1586 = vld [vmem:[%s1577 + $0x20] sm:$0xf]
    %v1587 = vld [vmem:[%s1577 + $0x24] sm:$0xf]
    %v1588 = vld [vmem:[%s1577 + $0x28] sm:$0xf]
    %v1589 = vld [vmem:[%s1577 + $0x2c] sm:$0xf]
    %v1590 = vld [vmem:[%s1577 + $0x30] sm:$0xf]
    %v1591 = vld [vmem:[%s1577 + $0x34] sm:$0xf]
    %v1592 = vld [vmem:[%s1577 + $0x38] sm:$0xf]
    %v1593 = vld [vmem:[%s1577 + $0x3c] sm:$0xf]
    %v1613 = vunpack.c.l.b16 %v1558
    %v1614 = vunpack.c.l.b16 %v1559
    %v1615 = vunpack.c.l.b16 %v1560
    %v1616 = vunpack.c.l.b16 %v1561
    %v1617 = vunpack.c.l.b16 %v1562
    %v1618 = vunpack.c.l.b16 %v1563
    %v1619 = vunpack.c.l.b16 %v1564
    %v1620 = vunpack.c.l.b16 %v1565
    %v1621 = vunpack.c.l.b16 %v1566
    %v1622 = vunpack.c.l.b16 %v1567
    %v1623 = vunpack.c.l.b16 %v1568
    %v1624 = vunpack.c.l.b16 %v1569
    %v1625 = vunpack.c.l.b16 %v1570
    %v1626 = vunpack.c.l.b16 %v1571
    %v1627 = vunpack.c.l.b16 %v1572
    %v1628 = vunpack.c.l.b16 %v1573
    %v1629 = vunpack.c.l.b16 %v1574
    %v1630 = vunpack.c.l.b16 %v1575
    %v1631 = vunpack.c.l.b16 %v1576
    %v1632 = vpack.c.b16 %v1614, %v1613
    %v1633 = vpack.c.b16 %v1616, %v1615
    %v1634 = vpack.c.b16 %v1618, %v1617
    %v1635 = vpack.c.b16 %v1620, %v1619
    %v1636 = vpack.c.b16 %v1622, %v1621
    %v1637 = vpack.c.b16 %v1624, %v1623
    %v1638 = vpack.c.b16 %v1626, %v1625
    %v1639 = vpack.c.b16 %v1628, %v1627
    %v1640 = vpack.c.b16 %v1630, %v1629
    %v1641 = vpack.c.b16 %v1631, %v1631
    %v1642 = vrot.slane %v1632, 2
    %v1643 = vrot.slane %v1633, 2
    %v1644 = vsel %vm707, %v1642, %v1643
    %v1645 = vrot.slane %v1634, 2
    %v1646 = vsel %vm707, %v1643, %v1645
    %v1647 = vrot.slane %v1635, 2
    %v1648 = vsel %vm707, %v1645, %v1647
    %v1649 = vrot.slane %v1636, 2
    %v1650 = vsel %vm707, %v1647, %v1649
    %v1651 = vrot.slane %v1637, 2
    %v1652 = vsel %vm707, %v1649, %v1651
    %v1653 = vrot.slane %v1638, 2
    %v1654 = vsel %vm707, %v1651, %v1653
    %v1655 = vrot.slane %v1639, 2
    %v1656 = vsel %vm707, %v1653, %v1655
    %v1657 = vrot.slane %v1640, 2
    %v1658 = vsel %vm707, %v1655, %v1657
    %v1659 = vrot.slane %v1641, 2
    %v1660 = vsel %vm707, %v1657, %v1659
    %v1686 = vunpack.c.l.b16 %v1578
    %v1687 = vunpack.c.l.b16 %v1579
    %v1688 = vunpack.c.l.b16 %v1580
    %v1689 = vunpack.c.l.b16 %v1581
    %v1690 = vunpack.c.l.b16 %v1582
    %v1691 = vunpack.c.l.b16 %v1583
    %v1692 = vunpack.c.l.b16 %v1584
    %v1693 = vunpack.c.l.b16 %v1585
    %v1694 = vunpack.c.l.b16 %v1586
    %v1695 = vunpack.c.l.b16 %v1587
    %v1696 = vunpack.c.l.b16 %v1588
    %v1697 = vunpack.c.l.b16 %v1589
    %v1698 = vunpack.c.l.b16 %v1590
    %v1699 = vunpack.c.l.b16 %v1591
    %v1700 = vunpack.c.l.b16 %v1592
    %v1701 = vunpack.c.l.b16 %v1593
    %v1702 = vpack.c.b16 %v1687, %v1686
    %v1703 = vpack.c.b16 %v1689, %v1688
    %v1704 = vpack.c.b16 %v1691, %v1690
    %v1705 = vpack.c.b16 %v1693, %v1692
    %v1706 = vpack.c.b16 %v1695, %v1694
    %v1707 = vpack.c.b16 %v1697, %v1696
    %v1708 = vpack.c.b16 %v1699, %v1698
    %v1709 = vpack.c.b16 %v1701, %v1700
    %1718 = vmatprep.subr.bf16.mxu0 0
    %1719 = vmatpush1.bf16.msra.mxu0 %v1702
    %1720 = vmatprep.subr.bf16.mxu0 0
    %1721 = vmatpush1.bf16.msra.mxu0 %v1703
    %1722 = vmatprep.subr.bf16.mxu0 0
    %1723 = vmatpush1.bf16.msra.mxu0 %v1704
    %1724 = vmatprep.subr.bf16.mxu0 0
    %1725 = vmatpush1.bf16.msra.mxu0 %v1705
    %1726 = vmatprep.subr.bf16.mxu0 0
    %1727 = vmatpush1.bf16.msra.mxu0 %v1706
    %1728 = vmatprep.subr.bf16.mxu0 0
    %1729 = vmatpush1.bf16.msra.mxu0 %v1707
    %1730 = vmatprep.subr.bf16.mxu0 0
    %1731 = vmatpush1.bf16.msra.mxu0 %v1708
    %1732 = vmatprep.subr.bf16.mxu0 0
    %1733 = vmatpush1.bf16.msra.mxu0 %v1709
    %1734 = vmatprep.subr.bf16.mxu0 0
    %1735 = vmatpush1.bf16.msra.mxu0 0
    %1736 = vmatprep.subr.bf16.mxu0 0
    %1737 = vmatpush1.bf16.msra.mxu0 0
    %1738 = vmatprep.subr.bf16.mxu0 0
    %1739 = vmatpush1.bf16.msra.mxu0 0
    %1740 = vmatprep.subr.bf16.mxu0 0
    %1741 = vmatpush1.bf16.msra.mxu0 0
    %1742 = vmatprep.subr.bf16.mxu0 0
    %1743 = vmatpush1.bf16.msra.mxu0 0
    %1744 = vmatprep.subr.bf16.mxu0 0
    %1745 = vmatpush1.bf16.msra.mxu0 0
    %1746 = vmatprep.subr.bf16.mxu0 0
    %1747 = vmatpush1.bf16.msra.mxu0 0
    %1748 = vmatprep.subr.bf16.mxu0 0
    %1749 = vmatpush1.bf16.msra.mxu0 0
    %1750 = vmatprep.mubr.bf16.mxu0 0
    %1751 = vmatmul.mubr.bf16.gmra.mrb[0].mxu0 %v1644
    %v1752 = vpop.f32.mrb[0].mxu0
    %v1753 = vadd.f32 0.0, %v1752
    %v1754 = vpop.f32.mrb[0].mxu0
    %v1755 = vpop.f32.mrb[0].mxu0
    %v1756 = vadd.f32 0.0, %v1755
    %v1757 = vpop.f32.mrb[0].mxu0
    %1758 = vmatprep.mubr.bf16.mxu0 0
    %1759 = vmatmul.mubr.bf16.gmra.mrb[0].mxu0 %v1646
    %v1760 = vpop.f32.mrb[0].mxu0
    %v1761 = vadd.f32 0.0, %v1760
    %v1762 = vpop.f32.mrb[0].mxu0
    %v1763 = vpop.f32.mrb[0].mxu0
    %v1764 = vadd.f32 0.0, %v1763
    %v1765 = vpop.f32.mrb[0].mxu0
    %1766 = vmatprep.mubr.bf16.mxu0 0
    %1767 = vmatmul.mubr.bf16.gmra.mrb[0].mxu0 %v1648
    %v1768 = vpop.f32.mrb[0].mxu0
    %v1769 = vadd.f32 0.0, %v1768
    %v1770 = vpop.f32.mrb[0].mxu0
    %v1771 = vpop.f32.mrb[0].mxu0
    %v1772 = vadd.f32 0.0, %v1771
    %v1773 = vpop.f32.mrb[0].mxu0
    %1774 = vmatprep.mubr.bf16.mxu0 0
    %1775 = vmatmul.mubr.bf16.gmra.mrb[0].mxu0 %v1650
    %v1776 = vpop.f32.mrb[0].mxu0
    %v1777 = vadd.f32 0.0, %v1776
    %v1778 = vpop.f32.mrb[0].mxu0
    %v1779 = vpop.f32.mrb[0].mxu0
    %v1780 = vadd.f32 0.0, %v1779
    %v1781 = vpop.f32.mrb[0].mxu0
    %1782 = vmatprep.mubr.bf16.mxu0 0
    %1783 = vmatmul.mubr.bf16.gmra.mrb[0].mxu0 %v1652
    %v1784 = vpop.f32.mrb[0].mxu0
    %v1785 = vadd.f32 0.0, %v1784
    %v1786 = vpop.f32.mrb[0].mxu0
    %v1787 = vpop.f32.mrb[0].mxu0
    %v1788 = vadd.f32 0.0, %v1787
    %v1789 = vpop.f32.mrb[0].mxu0
    %1790 = vmatprep.mubr.bf16.mxu0 0
    %1791 = vmatmul.mubr.bf16.gmra.mrb[0].mxu0 %v1654
    %v1792 = vpop.f32.mrb[0].mxu0
    %v1793 = vadd.f32 0.0, %v1792
    %v1794 = vpop.f32.mrb[0].mxu0
    %v1795 = vpop.f32.mrb[0].mxu0
    %v1796 = vadd.f32 0.0, %v1795
    %v1797 = vpop.f32.mrb[0].mxu0
    %1798 = vmatprep.mubr.bf16.mxu0 0
    %1799 = vmatmul.mubr.bf16.gmra.mrb[0].mxu0 %v1656
    %v1800 = vpop.f32.mrb[0].mxu0
    %v1801 = vadd.f32 0.0, %v1800
    %v1802 = vpop.f32.mrb[0].mxu0
    %v1803 = vpop.f32.mrb[0].mxu0
    %v1804 = vadd.f32 0.0, %v1803
    %v1805 = vpop.f32.mrb[0].mxu0
    %1806 = vmatprep.mubr.bf16.mxu0 0
    %1807 = vmatmul.mubr.bf16.gmra.mrb[0].mxu0 %v1658
    %v1808 = vpop.f32.mrb[0].mxu0
    %v1809 = vadd.f32 0.0, %v1808
    %v1810 = vpop.f32.mrb[0].mxu0
    %v1811 = vpop.f32.mrb[0].mxu0
    %v1812 = vadd.f32 0.0, %v1811
    %v1813 = vpop.f32.mrb[0].mxu0
    %1814 = vmatprep.mubr.bf16.mxu0 0
    %1815 = vmatmul.mubr.bf16.gmra.mrb[0].mxu0 %v1660
    %v1816 = vpop.f32.mrb[0].mxu0
    %v1817 = vadd.f32 0.0, %v1816
    %v1818 = vpop.f32.mrb[0].mxu0
    %v1819 = vpop.f32.mrb[0].mxu0
    %v1820 = vadd.f32 0.0, %v1819
    %v1821 = vpop.f32.mrb[0].mxu0
    %1822 = vdwg.mxu0
    %v1823 = vld [vmem:[#allocation2] sm:$0xff]
    %v1824 = vld [vmem:[#allocation2 + $0x8] sm:$0xff]
    %v1825 = vld [vmem:[#allocation2 + $0x10] sm:$0xff]
    %v1826 = vld [vmem:[#allocation2 + $0x18] sm:$0xff]
    %v1827 = vld [vmem:[#allocation2 + $0x20] sm:$0xff]
    %v1828 = vld [vmem:[#allocation2 + $0x28] sm:$0xff]
    %v1829 = vld [vmem:[#allocation2 + $0x30] sm:$0xff]
    %v1830 = vld [vmem:[#allocation2 + $0x38] sm:$0xff]
    %v1831 = vld [vmem:[#allocation2 + $0x40] sm:$0xff]
    %v1832 = vld [vmem:[#allocation2 + $0x48] sm:$0xff]
    %v1833 = vld [vmem:[#allocation2 + $0x50] sm:$0xff]
    %v1834 = vld [vmem:[#allocation2 + $0x58] sm:$0xff]
    %v1835 = vld [vmem:[#allocation2 + $0x60] sm:$0xff]
    %v1836 = vld [vmem:[#allocation2 + $0x68] sm:$0xff]
    %v1837 = vld [vmem:[#allocation2 + $0x70] sm:$0xff]
    %v1838 = vld [vmem:[#allocation2 + $0x78] sm:$0xff]
    %v1839 = vld [vmem:[#allocation2 + $0x80] sm:$0xff]
    %v1840 = vld [vmem:[#allocation2 + $0x88] sm:$0xff]
    %v1841 = vadd.f32 %v1823, %v1753
    %v1842 = vadd.f32 %v1824, %v1756
    %v1843 = vadd.f32 %v1825, %v1761
    %v1844 = vadd.f32 %v1826, %v1764
    %v1845 = vadd.f32 %v1827, %v1769
    %v1846 = vadd.f32 %v1828, %v1772
    %v1847 = vadd.f32 %v1829, %v1777
    %v1848 = vadd.f32 %v1830, %v1780
    %v1849 = vadd.f32 %v1831, %v1785
    %v1850 = vadd.f32 %v1832, %v1788
    %v1851 = vadd.f32 %v1833, %v1793
    %v1852 = vadd.f32 %v1834, %v1796
    %v1853 = vadd.f32 %v1835, %v1801
    %v1854 = vadd.f32 %v1836, %v1804
    %v1855 = vadd.f32 %v1837, %v1809
    %v1856 = vadd.f32 %v1838, %v1812
    %v1857 = vadd.f32 %v1839, %v1817
    %v1858 = vadd.f32 %v1840, %v1820
    %1859 = vst [vmem:[#allocation2] sm:$0xff] %v1841
    %1860 = vst [vmem:[#allocation2 + $0x8] sm:$0xff] %v1842
    %1861 = vst [vmem:[#allocation2 + $0x10] sm:$0xff] %v1843
    %1862 = vst [vmem:[#allocation2 + $0x18] sm:$0xff] %v1844
    %1863 = vst [vmem:[#allocation2 + $0x20] sm:$0xff] %v1845
    %1864 = vst [vmem:[#allocation2 + $0x28] sm:$0xff] %v1846
    %1865 = vst [vmem:[#allocation2 + $0x30] sm:$0xff] %v1847
    %1866 = vst [vmem:[#allocation2 + $0x38] sm:$0xff] %v1848
    %1867 = vst [vmem:[#allocation2 + $0x40] sm:$0xff] %v1849
    %1868 = vst [vmem:[#allocation2 + $0x48] sm:$0xff] %v1850
    %1869 = vst [vmem:[#allocation2 + $0x50] sm:$0xff] %v1851
    %1870 = vst [vmem:[#allocation2 + $0x58] sm:$0xff] %v1852
    %1871 = vst [vmem:[#allocation2 + $0x60] sm:$0xff] %v1853
    %1872 = vst [vmem:[#allocation2 + $0x68] sm:$0xff] %v1854
    %1873 = vst [vmem:[#allocation2 + $0x70] sm:$0xff] %v1855
    %1874 = vst [vmem:[#allocation2 + $0x78] sm:$0xff] %v1856
    %1875 = vst [vmem:[#allocation2 + $0x80] sm:$0xff] %v1857
    %1876 = vst [vmem:[#allocation2 + $0x88] sm:$0xff] %v1858
    %v1877 = vld [vmem:[#allocation3 + $0x18] sm:$0xf]
    %v1878 = vld [vmem:[#allocation3 + $0x1c] sm:$0xf]
    %v1879 = vld [vmem:[#allocation3 + $0x20] sm:$0xf]
    %v1880 = vld [vmem:[#allocation3 + $0x24] sm:$0xf]
    %v1881 = vld [vmem:[#allocation3 + $0x28] sm:$0xf]
    %v1882 = vld [vmem:[#allocation3 + $0x2c] sm:$0xf]
    %v1883 = vld [vmem:[#allocation3 + $0x30] sm:$0xf]
    %v1884 = vld [vmem:[#allocation3 + $0x34] sm:$0xf]
    %v1885 = vld [vmem:[#allocation3 + $0x38] sm:$0xf]
    %v1886 = vld [vmem:[#allocation3 + $0x3c] sm:$0xf]
    %v1887 = vld [vmem:[#allocation3 + $0x40] sm:$0xf]
    %v1888 = vld [vmem:[#allocation3 + $0x44] sm:$0xf]
    %v1889 = vld [vmem:[#allocation3 + $0x48] sm:$0xf]
    %v1890 = vld [vmem:[#allocation3 + $0x4c] sm:$0xf]
    %v1891 = vld [vmem:[#allocation3 + $0x50] sm:$0xf]
    %v1892 = vld [vmem:[#allocation3 + $0x54] sm:$0xf]
    %v1893 = vld [vmem:[#allocation3 + $0x58] sm:$0xf]
    %v1894 = vld [vmem:[#allocation3 + $0x5c] sm:$0xf]
    %s1895 = scalar_lea.vmem [#allocation6], 384
    %v1896 = vld [vmem:[%s1895] sm:$0xf]
    %v1897 = vld [vmem:[%s1895 + $0x4] sm:$0xf]
    %v1898 = vld [vmem:[%s1895 + $0x8] sm:$0xf]
    %v1899 = vld [vmem:[%s1895 + $0xc] sm:$0xf]
    %v1900 = vld [vmem:[%s1895 + $0x10] sm:$0xf]
    %v1901 = vld [vmem:[%s1895 + $0x14] sm:$0xf]
    %v1902 = vld [vmem:[%s1895 + $0x18] sm:$0xf]
    %v1903 = vld [vmem:[%s1895 + $0x1c] sm:$0xf]
    %v1904 = vld [vmem:[%s1895 + $0x20] sm:$0xf]
    %v1905 = vld [vmem:[%s1895 + $0x24] sm:$0xf]
    %v1906 = vld [vmem:[%s1895 + $0x28] sm:$0xf]
    %v1907 = vld [vmem:[%s1895 + $0x2c] sm:$0xf]
    %v1908 = vld [vmem:[%s1895 + $0x30] sm:$0xf]
    %v1909 = vld [vmem:[%s1895 + $0x34] sm:$0xf]
    %v1910 = vld [vmem:[%s1895 + $0x38] sm:$0xf]
    %v1911 = vld [vmem:[%s1895 + $0x3c] sm:$0xf]
    %v1930 = vunpack.c.l.b16 %v1877
    %v1931 = vunpack.c.l.b16 %v1878
    %v1932 = vunpack.c.l.b16 %v1879
    %v1933 = vunpack.c.l.b16 %v1880
    %v1934 = vunpack.c.l.b16 %v1881
    %v1935 = vunpack.c.l.b16 %v1882
    %v1936 = vunpack.c.l.b16 %v1883
    %v1937 = vunpack.c.l.b16 %v1884
    %v1938 = vunpack.c.l.b16 %v1885
    %v1939 = vunpack.c.l.b16 %v1886
    %v1940 = vunpack.c.l.b16 %v1887
    %v1941 = vunpack.c.l.b16 %v1888
    %v1942 = vunpack.c.l.b16 %v1889
    %v1943 = vunpack.c.l.b16 %v1890
    %v1944 = vunpack.c.l.b16 %v1891
    %v1945 = vunpack.c.l.b16 %v1892
    %v1946 = vunpack.c.l.b16 %v1893
    %v1947 = vunpack.c.l.b16 %v1894
    %v1948 = vpack.c.b16 %v1931, %v1930
    %v1949 = vpack.c.b16 %v1933, %v1932
    %v1950 = vpack.c.b16 %v1935, %v1934
    %v1951 = vpack.c.b16 %v1937, %v1936
    %v1952 = vpack.c.b16 %v1939, %v1938
    %v1953 = vpack.c.b16 %v1941, %v1940
    %v1954 = vpack.c.b16 %v1943, %v1942
    %v1955 = vpack.c.b16 %v1945, %v1944
    %v1956 = vpack.c.b16 %v1947, %v1946
    %v1982 = vunpack.c.l.b16 %v1896
    %v1983 = vunpack.c.l.b16 %v1897
    %v1984 = vunpack.c.l.b16 %v1898
    %v1985 = vunpack.c.l.b16 %v1899
    %v1986 = vunpack.c.l.b16 %v1900
    %v1987 = vunpack.c.l.b16 %v1901
    %v1988 = vunpack.c.l.b16 %v1902
    %v1989 = vunpack.c.l.b16 %v1903
    %v1990 = vunpack.c.l.b16 %v1904
    %v1991 = vunpack.c.l.b16 %v1905
    %v1992 = vunpack.c.l.b16 %v1906
    %v1993 = vunpack.c.l.b16 %v1907
    %v1994 = vunpack.c.l.b16 %v1908
    %v1995 = vunpack.c.l.b16 %v1909
    %v1996 = vunpack.c.l.b16 %v1910
    %v1997 = vunpack.c.l.b16 %v1911
    %v1998 = vpack.c.b16 %v1983, %v1982
    %v1999 = vpack.c.b16 %v1985, %v1984
    %v2000 = vpack.c.b16 %v1987, %v1986
    %v2001 = vpack.c.b16 %v1989, %v1988
    %v2002 = vpack.c.b16 %v1991, %v1990
    %v2003 = vpack.c.b16 %v1993, %v1992
    %v2004 = vpack.c.b16 %v1995, %v1994
    %v2005 = vpack.c.b16 %v1997, %v1996
    %2014 = vmatprep.subr.bf16.mxu0 0
    %2015 = vmatpush1.bf16.msra.mxu0 %v1998
    %2016 = vmatprep.subr.bf16.mxu0 0
    %2017 = vmatpush1.bf16.msra.mxu0 %v1999
    %2018 = vmatprep.subr.bf16.mxu0 0
    %2019 = vmatpush1.bf16.msra.mxu0 %v2000
    %2020 = vmatprep.subr.bf16.mxu0 0
    %2021 = vmatpush1.bf16.msra.mxu0 %v2001
    %2022 = vmatprep.subr.bf16.mxu0 0
    %2023 = vmatpush1.bf16.msra.mxu0 %v2002
    %2024 = vmatprep.subr.bf16.mxu0 0
    %2025 = vmatpush1.bf16.msra.mxu0 %v2003
    %2026 = vmatprep.subr.bf16.mxu0 0
    %2027 = vmatpush1.bf16.msra.mxu0 %v2004
    %2028 = vmatprep.subr.bf16.mxu0 0
    %2029 = vmatpush1.bf16.msra.mxu0 %v2005
    %2030 = vmatprep.subr.bf16.mxu0 0
    %2031 = vmatpush1.bf16.msra.mxu0 0
    %2032 = vmatprep.subr.bf16.mxu0 0
    %2033 = vmatpush1.bf16.msra.mxu0 0
    %2034 = vmatprep.subr.bf16.mxu0 0
    %2035 = vmatpush1.bf16.msra.mxu0 0
    %2036 = vmatprep.subr.bf16.mxu0 0
    %2037 = vmatpush1.bf16.msra.mxu0 0
    %2038 = vmatprep.subr.bf16.mxu0 0
    %2039 = vmatpush1.bf16.msra.mxu0 0
    %2040 = vmatprep.subr.bf16.mxu0 0
    %2041 = vmatpush1.bf16.msra.mxu0 0
    %2042 = vmatprep.subr.bf16.mxu0 0
    %2043 = vmatpush1.bf16.msra.mxu0 0
    %2044 = vmatprep.subr.bf16.mxu0 0
    %2045 = vmatpush1.bf16.msra.mxu0 0
    %2046 = vmatprep.mubr.bf16.mxu0 0
    %2047 = vmatmul.mubr.bf16.gmra.mrb[0].mxu0 %v1948
    %v2048 = vpop.f32.mrb[0].mxu0
    %v2049 = vadd.f32 0.0, %v2048
    %v2050 = vpop.f32.mrb[0].mxu0
    %v2051 = vpop.f32.mrb[0].mxu0
    %v2052 = vadd.f32 0.0, %v2051
    %v2053 = vpop.f32.mrb[0].mxu0
    %2054 = vmatprep.mubr.bf16.mxu0 0
    %2055 = vmatmul.mubr.bf16.gmra.mrb[0].mxu0 %v1949
    %v2056 = vpop.f32.mrb[0].mxu0
    %v2057 = vadd.f32 0.0, %v2056
    %v2058 = vpop.f32.mrb[0].mxu0
    %v2059 = vpop.f32.mrb[0].mxu0
    %v2060 = vadd.f32 0.0, %v2059
    %v2061 = vpop.f32.mrb[0].mxu0
    %2062 = vmatprep.mubr.bf16.mxu0 0
    %2063 = vmatmul.mubr.bf16.gmra.mrb[0].mxu0 %v1950
    %v2064 = vpop.f32.mrb[0].mxu0
    %v2065 = vadd.f32 0.0, %v2064
    %v2066 = vpop.f32.mrb[0].mxu0
    %v2067 = vpop.f32.mrb[0].mxu0
    %v2068 = vadd.f32 0.0, %v2067
    %v2069 = vpop.f32.mrb[0].mxu0
    %2070 = vmatprep.mubr.bf16.mxu0 0
    %2071 = vmatmul.mubr.bf16.gmra.mrb[0].mxu0 %v1951
    %v2072 = vpop.f32.mrb[0].mxu0
    %v2073 = vadd.f32 0.0, %v2072
    %v2074 = vpop.f32.mrb[0].mxu0
    %v2075 = vpop.f32.mrb[0].mxu0
    %v2076 = vadd.f32 0.0, %v2075
    %v2077 = vpop.f32.mrb[0].mxu0
    %2078 = vmatprep.mubr.bf16.mxu0 0
    %2079 = vmatmul.mubr.bf16.gmra.mrb[0].mxu0 %v1952
    %v2080 = vpop.f32.mrb[0].mxu0
    %v2081 = vadd.f32 0.0, %v2080
    %v2082 = vpop.f32.mrb[0].mxu0
    %v2083 = vpop.f32.mrb[0].mxu0
    %v2084 = vadd.f32 0.0, %v2083
    %v2085 = vpop.f32.mrb[0].mxu0
    %2086 = vmatprep.mubr.bf16.mxu0 0
    %2087 = vmatmul.mubr.bf16.gmra.mrb[0].mxu0 %v1953
    %v2088 = vpop.f32.mrb[0].mxu0
    %v2089 = vadd.f32 0.0, %v2088
    %v2090 = vpop.f32.mrb[0].mxu0
    %v2091 = vpop.f32.mrb[0].mxu0
    %v2092 = vadd.f32 0.0, %v2091
    %v2093 = vpop.f32.mrb[0].mxu0
    %2094 = vmatprep.mubr.bf16.mxu0 0
    %2095 = vmatmul.mubr.bf16.gmra.mrb[0].mxu0 %v1954
    %v2096 = vpop.f32.mrb[0].mxu0
    %v2097 = vadd.f32 0.0, %v2096
    %v2098 = vpop.f32.mrb[0].mxu0
    %v2099 = vpop.f32.mrb[0].mxu0
    %v2100 = vadd.f32 0.0, %v2099
    %v2101 = vpop.f32.mrb[0].mxu0
    %2102 = vmatprep.mubr.bf16.mxu0 0
    %2103 = vmatmul.mubr.bf16.gmra.mrb[0].mxu0 %v1955
    %v2104 = vpop.f32.mrb[0].mxu0
    %v2105 = vadd.f32 0.0, %v2104
    %v2106 = vpop.f32.mrb[0].mxu0
    %v2107 = vpop.f32.mrb[0].mxu0
    %v2108 = vadd.f32 0.0, %v2107
    %v2109 = vpop.f32.mrb[0].mxu0
    %2110 = vmatprep.mubr.bf16.mxu0 0
    %2111 = vmatmul.mubr.bf16.gmra.mrb[0].mxu0 %v1956
    %v2112 = vpop.f32.mrb[0].mxu0
    %v2113 = vadd.f32 0.0, %v2112
    %v2114 = vpop.f32.mrb[0].mxu0
    %v2115 = vpop.f32.mrb[0].mxu0
    %v2116 = vadd.f32 0.0, %v2115
    %v2117 = vpop.f32.mrb[0].mxu0
    %2118 = vdwg.mxu0
    %v2119 = vld [vmem:[#allocation2] sm:$0xff]
    %v2120 = vld [vmem:[#allocation2 + $0x8] sm:$0xff]
    %v2121 = vld [vmem:[#allocation2 + $0x10] sm:$0xff]
    %v2122 = vld [vmem:[#allocation2 + $0x18] sm:$0xff]
    %v2123 = vld [vmem:[#allocation2 + $0x20] sm:$0xff]
    %v2124 = vld [vmem:[#allocation2 + $0x28] sm:$0xff]
    %v2125 = vld [vmem:[#allocation2 + $0x30] sm:$0xff]
    %v2126 = vld [vmem:[#allocation2 + $0x38] sm:$0xff]
    %v2127 = vld [vmem:[#allocation2 + $0x40] sm:$0xff]
    %v2128 = vld [vmem:[#allocation2 + $0x48] sm:$0xff]
    %v2129 = vld [vmem:[#allocation2 + $0x50] sm:$0xff]
    %v2130 = vld [vmem:[#allocation2 + $0x58] sm:$0xff]
    %v2131 = vld [vmem:[#allocation2 + $0x60] sm:$0xff]
    %v2132 = vld [vmem:[#allocation2 + $0x68] sm:$0xff]
    %v2133 = vld [vmem:[#allocation2 + $0x70] sm:$0xff]
    %v2134 = vld [vmem:[#allocation2 + $0x78] sm:$0xff]
    %v2135 = vld [vmem:[#allocation2 + $0x80] sm:$0xff]
    %v2136 = vld [vmem:[#allocation2 + $0x88] sm:$0xff]
    %v2137 = vadd.f32 %v2119, %v2049
    %v2138 = vadd.f32 %v2120, %v2052
    %v2139 = vadd.f32 %v2121, %v2057
    %v2140 = vadd.f32 %v2122, %v2060
    %v2141 = vadd.f32 %v2123, %v2065
    %v2142 = vadd.f32 %v2124, %v2068
    %v2143 = vadd.f32 %v2125, %v2073
    %v2144 = vadd.f32 %v2126, %v2076
    %v2145 = vadd.f32 %v2127, %v2081
    %v2146 = vadd.f32 %v2128, %v2084
    %v2147 = vadd.f32 %v2129, %v2089
    %v2148 = vadd.f32 %v2130, %v2092
    %v2149 = vadd.f32 %v2131, %v2097
    %v2150 = vadd.f32 %v2132, %v2100
    %v2151 = vadd.f32 %v2133, %v2105
    %v2152 = vadd.f32 %v2134, %v2108
    %v2153 = vadd.f32 %v2135, %v2113
    %v2154 = vadd.f32 %v2136, %v2116
    %2155 = vst [vmem:[#allocation2] sm:$0xff] %v2137
    %2156 = vst [vmem:[#allocation2 + $0x8] sm:$0xff] %v2138
    %2157 = vst [vmem:[#allocation2 + $0x10] sm:$0xff] %v2139
    %2158 = vst [vmem:[#allocation2 + $0x18] sm:$0xff] %v2140
    %2159 = vst [vmem:[#allocation2 + $0x20] sm:$0xff] %v2141
    %2160 = vst [vmem:[#allocation2 + $0x28] sm:$0xff] %v2142
    %2161 = vst [vmem:[#allocation2 + $0x30] sm:$0xff] %v2143
    %2162 = vst [vmem:[#allocation2 + $0x38] sm:$0xff] %v2144
    %2163 = vst [vmem:[#allocation2 + $0x40] sm:$0xff] %v2145
    %2164 = vst [vmem:[#allocation2 + $0x48] sm:$0xff] %v2146
    %2165 = vst [vmem:[#allocation2 + $0x50] sm:$0xff] %v2147
    %2166 = vst [vmem:[#allocation2 + $0x58] sm:$0xff] %v2148
    %2167 = vst [vmem:[#allocation2 + $0x60] sm:$0xff] %v2149
    %2168 = vst [vmem:[#allocation2 + $0x68] sm:$0xff] %v2150
    %2169 = vst [vmem:[#allocation2 + $0x70] sm:$0xff] %v2151
    %2170 = vst [vmem:[#allocation2 + $0x78] sm:$0xff] %v2152
    %2171 = vst [vmem:[#allocation2 + $0x80] sm:$0xff] %v2153
    %2172 = vst [vmem:[#allocation2 + $0x88] sm:$0xff] %v2154
    %v2173 = vld [vmem:[#allocation3 + $0x18] sm:$0xe]
    %v2174 = vld [vmem:[#allocation3 + $0x1c] sm:$0xf]
    %v2175 = vld [vmem:[#allocation3 + $0x20] sm:$0xf]
    %v2176 = vld [vmem:[#allocation3 + $0x24] sm:$0xf]
    %v2177 = vld [vmem:[#allocation3 + $0x28] sm:$0xf]
    %v2178 = vld [vmem:[#allocation3 + $0x2c] sm:$0xf]
    %v2179 = vld [vmem:[#allocation3 + $0x30] sm:$0xf]
    %v2180 = vld [vmem:[#allocation3 + $0x34] sm:$0xf]
    %v2181 = vld [vmem:[#allocation3 + $0x38] sm:$0xf]
    %v2182 = vld [vmem:[#allocation3 + $0x3c] sm:$0xf]
    %v2183 = vld [vmem:[#allocation3 + $0x40] sm:$0xf]
    %v2184 = vld [vmem:[#allocation3 + $0x44] sm:$0xf]
    %v2185 = vld [vmem:[#allocation3 + $0x48] sm:$0xf]
    %v2186 = vld [vmem:[#allocation3 + $0x4c] sm:$0xf]
    %v2187 = vld [vmem:[#allocation3 + $0x50] sm:$0xf]
    %v2188 = vld [vmem:[#allocation3 + $0x54] sm:$0xf]
    %v2189 = vld [vmem:[#allocation3 + $0x58] sm:$0xf]
    %v2190 = vld [vmem:[#allocation3 + $0x5c] sm:$0xf]
    %v2191 = vld [vmem:[#allocation3 + $0x60] sm:$0x1]
    %s2192 = scalar_lea.vmem [#allocation6], 448
    %v2193 = vld [vmem:[%s2192] sm:$0xf]
    %v2194 = vld [vmem:[%s2192 + $0x4] sm:$0xf]
    %v2195 = vld [vmem:[%s2192 + $0x8] sm:$0xf]
    %v2196 = vld [vmem:[%s2192 + $0xc] sm:$0xf]
    %v2197 = vld [vmem:[%s2192 + $0x10] sm:$0xf]
    %v2198 = vld [vmem:[%s2192 + $0x14] sm:$0xf]
    %v2199 = vld [vmem:[%s2192 + $0x18] sm:$0xf]
    %v2200 = vld [vmem:[%s2192 + $0x1c] sm:$0xf]
    %v2201 = vld [vmem:[%s2192 + $0x20] sm:$0xf]
    %v2202 = vld [vmem:[%s2192 + $0x24] sm:$0xf]
    %v2203 = vld [vmem:[%s2192 + $0x28] sm:$0xf]
    %v2204 = vld [vmem:[%s2192 + $0x2c] sm:$0xf]
    %v2205 = vld [vmem:[%s2192 + $0x30] sm:$0xf]
    %v2206 = vld [vmem:[%s2192 + $0x34] sm:$0xf]
    %v2207 = vld [vmem:[%s2192 + $0x38] sm:$0xf]
    %v2208 = vld [vmem:[%s2192 + $0x3c] sm:$0xf]
    %v2228 = vunpack.c.l.b16 %v2173
    %v2229 = vunpack.c.l.b16 %v2174
    %v2230 = vunpack.c.l.b16 %v2175
    %v2231 = vunpack.c.l.b16 %v2176
    %v2232 = vunpack.c.l.b16 %v2177
    %v2233 = vunpack.c.l.b16 %v2178
    %v2234 = vunpack.c.l.b16 %v2179
    %v2235 = vunpack.c.l.b16 %v2180
    %v2236 = vunpack.c.l.b16 %v2181
    %v2237 = vunpack.c.l.b16 %v2182
    %v2238 = vunpack.c.l.b16 %v2183
    %v2239 = vunpack.c.l.b16 %v2184
    %v2240 = vunpack.c.l.b16 %v2185
    %v2241 = vunpack.c.l.b16 %v2186
    %v2242 = vunpack.c.l.b16 %v2187
    %v2243 = vunpack.c.l.b16 %v2188
    %v2244 = vunpack.c.l.b16 %v2189
    %v2245 = vunpack.c.l.b16 %v2190
    %v2246 = vunpack.c.l.b16 %v2191
    %v2247 = vpack.c.b16 %v2229, %v2228
    %v2248 = vpack.c.b16 %v2231, %v2230
    %v2249 = vpack.c.b16 %v2233, %v2232
    %v2250 = vpack.c.b16 %v2235, %v2234
    %v2251 = vpack.c.b16 %v2237, %v2236
    %v2252 = vpack.c.b16 %v2239, %v2238
    %v2253 = vpack.c.b16 %v2241, %v2240
    %v2254 = vpack.c.b16 %v2243, %v2242
    %v2255 = vpack.c.b16 %v2245, %v2244
    %v2256 = vpack.c.b16 %v2246, %v2246
    %v2257 = vrot.slane %v2247, 1
    %v2258 = vrot.slane %v2248, 1
    %v2259 = vsel %vm387, %v2257, %v2258
    %v2260 = vrot.slane %v2249, 1
    %v2261 = vsel %vm387, %v2258, %v2260
    %v2262 = vrot.slane %v2250, 1
    %v2263 = vsel %vm387, %v2260, %v2262
    %v2264 = vrot.slane %v2251, 1
    %v2265 = vsel %vm387, %v2262, %v2264
    %v2266 = vrot.slane %v2252, 1
    %v2267 = vsel %vm387, %v2264, %v2266
    %v2268 = vrot.slane %v2253, 1
    %v2269 = vsel %vm387, %v2266, %v2268
    %v2270 = vrot.slane %v2254, 1
    %v2271 = vsel %vm387, %v2268, %v2270
    %v2272 = vrot.slane %v2255, 1
    %v2273 = vsel %vm387, %v2270, %v2272
    %v2274 = vrot.slane %v2256, 1
    %v2275 = vsel %vm387, %v2272, %v2274
    %v2301 = vunpack.c.l.b16 %v2193
    %v2302 = vunpack.c.l.b16 %v2194
    %v2303 = vunpack.c.l.b16 %v2195
    %v2304 = vunpack.c.l.b16 %v2196
    %v2305 = vunpack.c.l.b16 %v2197
    %v2306 = vunpack.c.l.b16 %v2198
    %v2307 = vunpack.c.l.b16 %v2199
    %v2308 = vunpack.c.l.b16 %v2200
    %v2309 = vunpack.c.l.b16 %v2201
    %v2310 = vunpack.c.l.b16 %v2202
    %v2311 = vunpack.c.l.b16 %v2203
    %v2312 = vunpack.c.l.b16 %v2204
    %v2313 = vunpack.c.l.b16 %v2205
    %v2314 = vunpack.c.l.b16 %v2206
    %v2315 = vunpack.c.l.b16 %v2207
    %v2316 = vunpack.c.l.b16 %v2208
    %v2317 = vpack.c.b16 %v2302, %v2301
    %v2318 = vpack.c.b16 %v2304, %v2303
    %v2319 = vpack.c.b16 %v2306, %v2305
    %v2320 = vpack.c.b16 %v2308, %v2307
    %v2321 = vpack.c.b16 %v2310, %v2309
    %v2322 = vpack.c.b16 %v2312, %v2311
    %v2323 = vpack.c.b16 %v2314, %v2313
    %v2324 = vpack.c.b16 %v2316, %v2315
    %2333 = vmatprep.subr.bf16.mxu0 0
    %2334 = vmatpush1.bf16.msra.mxu0 %v2317
    %2335 = vmatprep.subr.bf16.mxu0 0
    %2336 = vmatpush1.bf16.msra.mxu0 %v2318
    %2337 = vmatprep.subr.bf16.mxu0 0
    %2338 = vmatpush1.bf16.msra.mxu0 %v2319
    %2339 = vmatprep.subr.bf16.mxu0 0
    %2340 = vmatpush1.bf16.msra.mxu0 %v2320
    %2341 = vmatprep.subr.bf16.mxu0 0
    %2342 = vmatpush1.bf16.msra.mxu0 %v2321
    %2343 = vmatprep.subr.bf16.mxu0 0
    %2344 = vmatpush1.bf16.msra.mxu0 %v2322
    %2345 = vmatprep.subr.bf16.mxu0 0
    %2346 = vmatpush1.bf16.msra.mxu0 %v2323
    %2347 = vmatprep.subr.bf16.mxu0 0
    %2348 = vmatpush1.bf16.msra.mxu0 %v2324
    %2349 = vmatprep.subr.bf16.mxu0 0
    %2350 = vmatpush1.bf16.msra.mxu0 0
    %2351 = vmatprep.subr.bf16.mxu0 0
    %2352 = vmatpush1.bf16.msra.mxu0 0
    %2353 = vmatprep.subr.bf16.mxu0 0
    %2354 = vmatpush1.bf16.msra.mxu0 0
    %2355 = vmatprep.subr.bf16.mxu0 0
    %2356 = vmatpush1.bf16.msra.mxu0 0
    %2357 = vmatprep.subr.bf16.mxu0 0
    %2358 = vmatpush1.bf16.msra.mxu0 0
    %2359 = vmatprep.subr.bf16.mxu0 0
    %2360 = vmatpush1.bf16.msra.mxu0 0
    %2361 = vmatprep.subr.bf16.mxu0 0
    %2362 = vmatpush1.bf16.msra.mxu0 0
    %2363 = vmatprep.subr.bf16.mxu0 0
    %2364 = vmatpush1.bf16.msra.mxu0 0
    %2365 = vmatprep.mubr.bf16.mxu0 0
    %2366 = vmatmul.mubr.bf16.gmra.mrb[0].mxu0 %v2259
    %v2367 = vpop.f32.mrb[0].mxu0
    %v2368 = vadd.f32 0.0, %v2367
    %v2369 = vpop.f32.mrb[0].mxu0
    %v2370 = vpop.f32.mrb[0].mxu0
    %v2371 = vadd.f32 0.0, %v2370
    %v2372 = vpop.f32.mrb[0].mxu0
    %2373 = vmatprep.mubr.bf16.mxu0 0
    %2374 = vmatmul.mubr.bf16.gmra.mrb[0].mxu0 %v2261
    %v2375 = vpop.f32.mrb[0].mxu0
    %v2376 = vadd.f32 0.0, %v2375
    %v2377 = vpop.f32.mrb[0].mxu0
    %v2378 = vpop.f32.mrb[0].mxu0
    %v2379 = vadd.f32 0.0, %v2378
    %v2380 = vpop.f32.mrb[0].mxu0
    %2381 = vmatprep.mubr.bf16.mxu0 0
    %2382 = vmatmul.mubr.bf16.gmra.mrb[0].mxu0 %v2263
    %v2383 = vpop.f32.mrb[0].mxu0
    %v2384 = vadd.f32 0.0, %v2383
    %v2385 = vpop.f32.mrb[0].mxu0
    %v2386 = vpop.f32.mrb[0].mxu0
    %v2387 = vadd.f32 0.0, %v2386
    %v2388 = vpop.f32.mrb[0].mxu0
    %2389 = vmatprep.mubr.bf16.mxu0 0
    %2390 = vmatmul.mubr.bf16.gmra.mrb[0].mxu0 %v2265
    %v2391 = vpop.f32.mrb[0].mxu0
    %v2392 = vadd.f32 0.0, %v2391
    %v2393 = vpop.f32.mrb[0].mxu0
    %v2394 = vpop.f32.mrb[0].mxu0
    %v2395 = vadd.f32 0.0, %v2394
    %v2396 = vpop.f32.mrb[0].mxu0
    %2397 = vmatprep.mubr.bf16.mxu0 0
    %2398 = vmatmul.mubr.bf16.gmra.mrb[0].mxu0 %v2267
    %v2399 = vpop.f32.mrb[0].mxu0
    %v2400 = vadd.f32 0.0, %v2399
    %v2401 = vpop.f32.mrb[0].mxu0
    %v2402 = vpop.f32.mrb[0].mxu0
    %v2403 = vadd.f32 0.0, %v2402
    %v2404 = vpop.f32.mrb[0].mxu0
    %2405 = vmatprep.mubr.bf16.mxu0 0
    %2406 = vmatmul.mubr.bf16.gmra.mrb[0].mxu0 %v2269
    %v2407 = vpop.f32.mrb[0].mxu0
    %v2408 = vadd.f32 0.0, %v2407
    %v2409 = vpop.f32.mrb[0].mxu0
    %v2410 = vpop.f32.mrb[0].mxu0
    %v2411 = vadd.f32 0.0, %v2410
    %v2412 = vpop.f32.mrb[0].mxu0
    %2413 = vmatprep.mubr.bf16.mxu0 0
    %2414 = vmatmul.mubr.bf16.gmra.mrb[0].mxu0 %v2271
    %v2415 = vpop.f32.mrb[0].mxu0
    %v2416 = vadd.f32 0.0, %v2415
    %v2417 = vpop.f32.mrb[0].mxu0
    %v2418 = vpop.f32.mrb[0].mxu0
    %v2419 = vadd.f32 0.0, %v2418
    %v2420 = vpop.f32.mrb[0].mxu0
    %2421 = vmatprep.mubr.bf16.mxu0 0
    %2422 = vmatmul.mubr.bf16.gmra.mrb[0].mxu0 %v2273
    %v2423 = vpop.f32.mrb[0].mxu0
    %v2424 = vadd.f32 0.0, %v2423
    %v2425 = vpop.f32.mrb[0].mxu0
    %v2426 = vpop.f32.mrb[0].mxu0
    %v2427 = vadd.f32 0.0, %v2426
    %v2428 = vpop.f32.mrb[0].mxu0
    %2429 = vmatprep.mubr.bf16.mxu0 0
    %2430 = vmatmul.mubr.bf16.gmra.mrb[0].mxu0 %v2275
    %v2431 = vpop.f32.mrb[0].mxu0
    %v2432 = vadd.f32 0.0, %v2431
    %v2433 = vpop.f32.mrb[0].mxu0
    %v2434 = vpop.f32.mrb[0].mxu0
    %v2435 = vadd.f32 0.0, %v2434
    %v2436 = vpop.f32.mrb[0].mxu0
    %2437 = vdwg.mxu0
    %v2438 = vld [vmem:[#allocation2] sm:$0xff]
    %v2439 = vld [vmem:[#allocation2 + $0x8] sm:$0xff]
    %v2440 = vld [vmem:[#allocation2 + $0x10] sm:$0xff]
    %v2441 = vld [vmem:[#allocation2 + $0x18] sm:$0xff]
    %v2442 = vld [vmem:[#allocation2 + $0x20] sm:$0xff]
    %v2443 = vld [vmem:[#allocation2 + $0x28] sm:$0xff]
    %v2444 = vld [vmem:[#allocation2 + $0x30] sm:$0xff]
    %v2445 = vld [vmem:[#allocation2 + $0x38] sm:$0xff]
    %v2446 = vld [vmem:[#allocation2 + $0x40] sm:$0xff]
    %v2447 = vld [vmem:[#allocation2 + $0x48] sm:$0xff]
    %v2448 = vld [vmem:[#allocation2 + $0x50] sm:$0xff]
    %v2449 = vld [vmem:[#allocation2 + $0x58] sm:$0xff]
    %v2450 = vld [vmem:[#allocation2 + $0x60] sm:$0xff]
    %v2451 = vld [vmem:[#allocation2 + $0x68] sm:$0xff]
    %v2452 = vld [vmem:[#allocation2 + $0x70] sm:$0xff]
    %v2453 = vld [vmem:[#allocation2 + $0x78] sm:$0xff]
    %v2454 = vld [vmem:[#allocation2 + $0x80] sm:$0xff]
    %v2455 = vld [vmem:[#allocation2 + $0x88] sm:$0xff]
    %v2456 = vadd.f32 %v2438, %v2368
    %v2457 = vadd.f32 %v2439, %v2371
    %v2458 = vadd.f32 %v2440, %v2376
    %v2459 = vadd.f32 %v2441, %v2379
    %v2460 = vadd.f32 %v2442, %v2384
    %v2461 = vadd.f32 %v2443, %v2387
    %v2462 = vadd.f32 %v2444, %v2392
    %v2463 = vadd.f32 %v2445, %v2395
    %v2464 = vadd.f32 %v2446, %v2400
    %v2465 = vadd.f32 %v2447, %v2403
    %v2466 = vadd.f32 %v2448, %v2408
    %v2467 = vadd.f32 %v2449, %v2411
    %v2468 = vadd.f32 %v2450, %v2416
    %v2469 = vadd.f32 %v2451, %v2419
    %v2470 = vadd.f32 %v2452, %v2424
    %v2471 = vadd.f32 %v2453, %v2427
    %v2472 = vadd.f32 %v2454, %v2432
    %v2473 = vadd.f32 %v2455, %v2435
    %2474 = vst [vmem:[#allocation2] sm:$0xff] %v2456
    %2475 = vst [vmem:[#allocation2 + $0x8] sm:$0xff] %v2457
    %2476 = vst [vmem:[#allocation2 + $0x10] sm:$0xff] %v2458
    %2477 = vst [vmem:[#allocation2 + $0x18] sm:$0xff] %v2459
    %2478 = vst [vmem:[#allocation2 + $0x20] sm:$0xff] %v2460
    %2479 = vst [vmem:[#allocation2 + $0x28] sm:$0xff] %v2461
    %2480 = vst [vmem:[#allocation2 + $0x30] sm:$0xff] %v2462
    %2481 = vst [vmem:[#allocation2 + $0x38] sm:$0xff] %v2463
    %2482 = vst [vmem:[#allocation2 + $0x40] sm:$0xff] %v2464
    %2483 = vst [vmem:[#allocation2 + $0x48] sm:$0xff] %v2465
    %2484 = vst [vmem:[#allocation2 + $0x50] sm:$0xff] %v2466
    %2485 = vst [vmem:[#allocation2 + $0x58] sm:$0xff] %v2467
    %2486 = vst [vmem:[#allocation2 + $0x60] sm:$0xff] %v2468
    %2487 = vst [vmem:[#allocation2 + $0x68] sm:$0xff] %v2469
    %2488 = vst [vmem:[#allocation2 + $0x70] sm:$0xff] %v2470
    %2489 = vst [vmem:[#allocation2 + $0x78] sm:$0xff] %v2471
    %2490 = vst [vmem:[#allocation2 + $0x80] sm:$0xff] %v2472
    %2491 = vst [vmem:[#allocation2 + $0x88] sm:$0xff] %v2473
    %v2492 = vld [vmem:[#allocation3 + $0x18] sm:$0xc]
    %v2493 = vld [vmem:[#allocation3 + $0x1c] sm:$0xf]
    %v2494 = vld [vmem:[#allocation3 + $0x20] sm:$0xf]
    %v2495 = vld [vmem:[#allocation3 + $0x24] sm:$0xf]
    %v2496 = vld [vmem:[#allocation3 + $0x28] sm:$0xf]
    %v2497 = vld [vmem:[#allocation3 + $0x2c] sm:$0xf]
    %v2498 = vld [vmem:[#allocation3 + $0x30] sm:$0xf]
    %v2499 = vld [vmem:[#allocation3 + $0x34] sm:$0xf]
    %v2500 = vld [vmem:[#allocation3 + $0x38] sm:$0xf]
    %v2501 = vld [vmem:[#allocation3 + $0x3c] sm:$0xf]
    %v2502 = vld [vmem:[#allocation3 + $0x40] sm:$0xf]
    %v2503 = vld [vmem:[#allocation3 + $0x44] sm:$0xf]
    %v2504 = vld [vmem:[#allocation3 + $0x48] sm:$0xf]
    %v2505 = vld [vmem:[#allocation3 + $0x4c] sm:$0xf]
    %v2506 = vld [vmem:[#allocation3 + $0x50] sm:$0xf]
    %v2507 = vld [vmem:[#allocation3 + $0x54] sm:$0xf]
    %v2508 = vld [vmem:[#allocation3 + $0x58] sm:$0xf]
    %v2509 = vld [vmem:[#allocation3 + $0x5c] sm:$0xf]
    %v2510 = vld [vmem:[#allocation3 + $0x60] sm:$0x3]
    %s2511 = scalar_lea.vmem [#allocation6], 512
    %v2512 = vld [vmem:[%s2511] sm:$0xf]
    %v2513 = vld [vmem:[%s2511 + $0x4] sm:$0xf]
    %v2514 = vld [vmem:[%s2511 + $0x8] sm:$0xf]
    %v2515 = vld [vmem:[%s2511 + $0xc] sm:$0xf]
    %v2516 = vld [vmem:[%s2511 + $0x10] sm:$0xf]
    %v2517 = vld [vmem:[%s2511 + $0x14] sm:$0xf]
    %v2518 = vld [vmem:[%s2511 + $0x18] sm:$0xf]
    %v2519 = vld [vmem:[%s2511 + $0x1c] sm:$0xf]
    %v2520 = vld [vmem:[%s2511 + $0x20] sm:$0xf]
    %v2521 = vld [vmem:[%s2511 + $0x24] sm:$0xf]
    %v2522 = vld [vmem:[%s2511 + $0x28] sm:$0xf]
    %v2523 = vld [vmem:[%s2511 + $0x2c] sm:$0xf]
    %v2524 = vld [vmem:[%s2511 + $0x30] sm:$0xf]
    %v2525 = vld [vmem:[%s2511 + $0x34] sm:$0xf]
    %v2526 = vld [vmem:[%s2511 + $0x38] sm:$0xf]
    %v2527 = vld [vmem:[%s2511 + $0x3c] sm:$0xf]
    %v2547 = vunpack.c.l.b16 %v2492
    %v2548 = vunpack.c.l.b16 %v2493
    %v2549 = vunpack.c.l.b16 %v2494
    %v2550 = vunpack.c.l.b16 %v2495
    %v2551 = vunpack.c.l.b16 %v2496
    %v2552 = vunpack.c.l.b16 %v2497
    %v2553 = vunpack.c.l.b16 %v2498
    %v2554 = vunpack.c.l.b16 %v2499
    %v2555 = vunpack.c.l.b16 %v2500
    %v2556 = vunpack.c.l.b16 %v2501
    %v2557 = vunpack.c.l.b16 %v2502
    %v2558 = vunpack.c.l.b16 %v2503
    %v2559 = vunpack.c.l.b16 %v2504
    %v2560 = vunpack.c.l.b16 %v2505
    %v2561 = vunpack.c.l.b16 %v2506
    %v2562 = vunpack.c.l.b16 %v2507
    %v2563 = vunpack.c.l.b16 %v2508
    %v2564 = vunpack.c.l.b16 %v2509
    %v2565 = vunpack.c.l.b16 %v2510
    %v2566 = vpack.c.b16 %v2548, %v2547
    %v2567 = vpack.c.b16 %v2550, %v2549
    %v2568 = vpack.c.b16 %v2552, %v2551
    %v2569 = vpack.c.b16 %v2554, %v2553
    %v2570 = vpack.c.b16 %v2556, %v2555
    %v2571 = vpack.c.b16 %v2558, %v2557
    %v2572 = vpack.c.b16 %v2560, %v2559
    %v2573 = vpack.c.b16 %v2562, %v2561
    %v2574 = vpack.c.b16 %v2564, %v2563
    %v2575 = vpack.c.b16 %v2565, %v2565
    %v2576 = vrot.slane %v2566, 2
    %v2577 = vrot.slane %v2567, 2
    %v2578 = vsel %vm707, %v2576, %v2577
    %v2579 = vrot.slane %v2568, 2
    %v2580 = vsel %vm707, %v2577, %v2579
    %v2581 = vrot.slane %v2569, 2
    %v2582 = vsel %vm707, %v2579, %v2581
    %v2583 = vrot.slane %v2570, 2
    %v2584 = vsel %vm707, %v2581, %v2583
    %v2585 = vrot.slane %v2571, 2
    %v2586 = vsel %vm707, %v2583, %v2585
    %v2587 = vrot.slane %v2572, 2
    %v2588 = vsel %vm707, %v2585, %v2587
    %v2589 = vrot.slane %v2573, 2
    %v2590 = vsel %vm707, %v2587, %v2589
    %v2591 = vrot.slane %v2574, 2
    %v2592 = vsel %vm707, %v2589, %v2591
    %v2593 = vrot.slane %v2575, 2
    %v2594 = vsel %vm707, %v2591, %v2593
    %v2620 = vunpack.c.l.b16 %v2512
    %v2621 = vunpack.c.l.b16 %v2513
    %v2622 = vunpack.c.l.b16 %v2514
    %v2623 = vunpack.c.l.b16 %v2515
    %v2624 = vunpack.c.l.b16 %v2516
    %v2625 = vunpack.c.l.b16 %v2517
    %v2626 = vunpack.c.l.b16 %v2518
    %v2627 = vunpack.c.l.b16 %v2519
    %v2628 = vunpack.c.l.b16 %v2520
    %v2629 = vunpack.c.l.b16 %v2521
    %v2630 = vunpack.c.l.b16 %v2522
    %v2631 = vunpack.c.l.b16 %v2523
    %v2632 = vunpack.c.l.b16 %v2524
    %v2633 = vunpack.c.l.b16 %v2525
    %v2634 = vunpack.c.l.b16 %v2526
    %v2635 = vunpack.c.l.b16 %v2527
    %v2636 = vpack.c.b16 %v2621, %v2620
    %v2637 = vpack.c.b16 %v2623, %v2622
    %v2638 = vpack.c.b16 %v2625, %v2624
    %v2639 = vpack.c.b16 %v2627, %v2626
    %v2640 = vpack.c.b16 %v2629, %v2628
    %v2641 = vpack.c.b16 %v2631, %v2630
    %v2642 = vpack.c.b16 %v2633, %v2632
    %v2643 = vpack.c.b16 %v2635, %v2634
    %2652 = vmatprep.subr.bf16.mxu0 0
    %2653 = vmatpush1.bf16.msra.mxu0 %v2636
    %2654 = vmatprep.subr.bf16.mxu0 0
    %2655 = vmatpush1.bf16.msra.mxu0 %v2637
    %2656 = vmatprep.subr.bf16.mxu0 0
    %2657 = vmatpush1.bf16.msra.mxu0 %v2638
    %2658 = vmatprep.subr.bf16.mxu0 0
    %2659 = vmatpush1.bf16.msra.mxu0 %v2639
    %2660 = vmatprep.subr.bf16.mxu0 0
    %2661 = vmatpush1.bf16.msra.mxu0 %v2640
    %2662 = vmatprep.subr.bf16.mxu0 0
    %2663 = vmatpush1.bf16.msra.mxu0 %v2641
    %2664 = vmatprep.subr.bf16.mxu0 0
    %2665 = vmatpush1.bf16.msra.mxu0 %v2642
    %2666 = vmatprep.subr.bf16.mxu0 0
    %2667 = vmatpush1.bf16.msra.mxu0 %v2643
    %2668 = vmatprep.subr.bf16.mxu0 0
    %2669 = vmatpush1.bf16.msra.mxu0 0
    %2670 = vmatprep.subr.bf16.mxu0 0
    %2671 = vmatpush1.bf16.msra.mxu0 0
    %2672 = vmatprep.subr.bf16.mxu0 0
    %2673 = vmatpush1.bf16.msra.mxu0 0
    %2674 = vmatprep.subr.bf16.mxu0 0
    %2675 = vmatpush1.bf16.msra.mxu0 0
    %2676 = vmatprep.subr.bf16.mxu0 0
    %2677 = vmatpush1.bf16.msra.mxu0 0
    %2678 = vmatprep.subr.bf16.mxu0 0
    %2679 = vmatpush1.bf16.msra.mxu0 0
    %2680 = vmatprep.subr.bf16.mxu0 0
    %2681 = vmatpush1.bf16.msra.mxu0 0
    %2682 = vmatprep.subr.bf16.mxu0 0
    %2683 = vmatpush1.bf16.msra.mxu0 0
    %2684 = vmatprep.mubr.bf16.mxu0 0
    %2685 = vmatmul.mubr.bf16.gmra.mrb[0].mxu0 %v2578
    %v2686 = vpop.f32.mrb[0].mxu0
    %v2687 = vadd.f32 0.0, %v2686
    %v2688 = vpop.f32.mrb[0].mxu0
    %v2689 = vpop.f32.mrb[0].mxu0
    %v2690 = vadd.f32 0.0, %v2689
    %v2691 = vpop.f32.mrb[0].mxu0
    %2692 = vmatprep.mubr.bf16.mxu0 0
    %2693 = vmatmul.mubr.bf16.gmra.mrb[0].mxu0 %v2580
    %v2694 = vpop.f32.mrb[0].mxu0
    %v2695 = vadd.f32 0.0, %v2694
    %v2696 = vpop.f32.mrb[0].mxu0
    %v2697 = vpop.f32.mrb[0].mxu0
    %v2698 = vadd.f32 0.0, %v2697
    %v2699 = vpop.f32.mrb[0].mxu0
    %2700 = vmatprep.mubr.bf16.mxu0 0
    %2701 = vmatmul.mubr.bf16.gmra.mrb[0].mxu0 %v2582
    %v2702 = vpop.f32.mrb[0].mxu0
    %v2703 = vadd.f32 0.0, %v2702
    %v2704 = vpop.f32.mrb[0].mxu0
    %v2705 = vpop.f32.mrb[0].mxu0
    %v2706 = vadd.f32 0.0, %v2705
    %v2707 = vpop.f32.mrb[0].mxu0
    %2708 = vmatprep.mubr.bf16.mxu0 0
    %2709 = vmatmul.mubr.bf16.gmra.mrb[0].mxu0 %v2584
    %v2710 = vpop.f32.mrb[0].mxu0
    %v2711 = vadd.f32 0.0, %v2710
    %v2712 = vpop.f32.mrb[0].mxu0
    %v2713 = vpop.f32.mrb[0].mxu0
    %v2714 = vadd.f32 0.0, %v2713
    %v2715 = vpop.f32.mrb[0].mxu0
    %2716 = vmatprep.mubr.bf16.mxu0 0
    %2717 = vmatmul.mubr.bf16.gmra.mrb[0].mxu0 %v2586
    %v2718 = vpop.f32.mrb[0].mxu0
    %v2719 = vadd.f32 0.0, %v2718
    %v2720 = vpop.f32.mrb[0].mxu0
    %v2721 = vpop.f32.mrb[0].mxu0
    %v2722 = vadd.f32 0.0, %v2721
    %v2723 = vpop.f32.mrb[0].mxu0
    %2724 = vmatprep.mubr.bf16.mxu0 0
    %2725 = vmatmul.mubr.bf16.gmra.mrb[0].mxu0 %v2588
    %v2726 = vpop.f32.mrb[0].mxu0
    %v2727 = vadd.f32 0.0, %v2726
    %v2728 = vpop.f32.mrb[0].mxu0
    %v2729 = vpop.f32.mrb[0].mxu0
    %v2730 = vadd.f32 0.0, %v2729
    %v2731 = vpop.f32.mrb[0].mxu0
    %2732 = vmatprep.mubr.bf16.mxu0 0
    %2733 = vmatmul.mubr.bf16.gmra.mrb[0].mxu0 %v2590
    %v2734 = vpop.f32.mrb[0].mxu0
    %v2735 = vadd.f32 0.0, %v2734
    %v2736 = vpop.f32.mrb[0].mxu0
    %v2737 = vpop.f32.mrb[0].mxu0
    %v2738 = vadd.f32 0.0, %v2737
    %v2739 = vpop.f32.mrb[0].mxu0
    %2740 = vmatprep.mubr.bf16.mxu0 0
    %2741 = vmatmul.mubr.bf16.gmra.mrb[0].mxu0 %v2592
    %v2742 = vpop.f32.mrb[0].mxu0
    %v2743 = vadd.f32 0.0, %v2742
    %v2744 = vpop.f32.mrb[0].mxu0
    %v2745 = vpop.f32.mrb[0].mxu0
    %v2746 = vadd.f32 0.0, %v2745
    %v2747 = vpop.f32.mrb[0].mxu0
    %2748 = vmatprep.mubr.bf16.mxu0 0
    %2749 = vmatmul.mubr.bf16.gmra.mrb[0].mxu0 %v2594
    %v2750 = vpop.f32.mrb[0].mxu0
    %v2751 = vadd.f32 0.0, %v2750
    %v2752 = vpop.f32.mrb[0].mxu0
    %v2753 = vpop.f32.mrb[0].mxu0
    %v2754 = vadd.f32 0.0, %v2753
    %v2755 = vpop.f32.mrb[0].mxu0
    %2756 = vdwg.mxu0
    %v2757 = vld [vmem:[#allocation2] sm:$0xff]
    %v2758 = vld [vmem:[#allocation2 + $0x8] sm:$0xff]
    %v2759 = vld [vmem:[#allocation2 + $0x10] sm:$0xff]
    %v2760 = vld [vmem:[#allocation2 + $0x18] sm:$0xff]
    %v2761 = vld [vmem:[#allocation2 + $0x20] sm:$0xff]
    %v2762 = vld [vmem:[#allocation2 + $0x28] sm:$0xff]
    %v2763 = vld [vmem:[#allocation2 + $0x30] sm:$0xff]
    %v2764 = vld [vmem:[#allocation2 + $0x38] sm:$0xff]
    %v2765 = vld [vmem:[#allocation2 + $0x40] sm:$0xff]
    %v2766 = vld [vmem:[#allocation2 + $0x48] sm:$0xff]
    %v2767 = vld [vmem:[#allocation2 + $0x50] sm:$0xff]
    %v2768 = vld [vmem:[#allocation2 + $0x58] sm:$0xff]
    %v2769 = vld [vmem:[#allocation2 + $0x60] sm:$0xff]
    %v2770 = vld [vmem:[#allocation2 + $0x68] sm:$0xff]
    %v2771 = vld [vmem:[#allocation2 + $0x70] sm:$0xff]
    %v2772 = vld [vmem:[#allocation2 + $0x78] sm:$0xff]
    %v2773 = vld [vmem:[#allocation2 + $0x80] sm:$0xff]
    %v2774 = vld [vmem:[#allocation2 + $0x88] sm:$0xff]
    %v2775 = vadd.f32 %v2757, %v2687
    %v2776 = vadd.f32 %v2758, %v2690
    %v2777 = vadd.f32 %v2759, %v2695
    %v2778 = vadd.f32 %v2760, %v2698
    %v2779 = vadd.f32 %v2761, %v2703
    %v2780 = vadd.f32 %v2762, %v2706
    %v2781 = vadd.f32 %v2763, %v2711
    %v2782 = vadd.f32 %v2764, %v2714
    %v2783 = vadd.f32 %v2765, %v2719
    %v2784 = vadd.f32 %v2766, %v2722
    %v2785 = vadd.f32 %v2767, %v2727
    %v2786 = vadd.f32 %v2768, %v2730
    %v2787 = vadd.f32 %v2769, %v2735
    %v2788 = vadd.f32 %v2770, %v2738
    %v2789 = vadd.f32 %v2771, %v2743
    %v2790 = vadd.f32 %v2772, %v2746
    %v2791 = vadd.f32 %v2773, %v2751
    %v2792 = vadd.f32 %v2774, %v2754
    %2793 = vst [vmem:[#allocation2] sm:$0xff] %v2775
    %2794 = vst [vmem:[#allocation2 + $0x8] sm:$0xff] %v2776
    %2795 = vst [vmem:[#allocation2 + $0x10] sm:$0xff] %v2777
    %2796 = vst [vmem:[#allocation2 + $0x18] sm:$0xff] %v2778
    %2797 = vst [vmem:[#allocation2 + $0x20] sm:$0xff] %v2779
    %2798 = vst [vmem:[#allocation2 + $0x28] sm:$0xff] %v2780
    %2799 = vst [vmem:[#allocation2 + $0x30] sm:$0xff] %v2781
    %2800 = vst [vmem:[#allocation2 + $0x38] sm:$0xff] %v2782
    %2801 = vst [vmem:[#allocation2 + $0x40] sm:$0xff] %v2783
    %2802 = vst [vmem:[#allocation2 + $0x48] sm:$0xff] %v2784
    %2803 = vst [vmem:[#allocation2 + $0x50] sm:$0xff] %v2785
    %2804 = vst [vmem:[#allocation2 + $0x58] sm:$0xff] %v2786
    %2805 = vst [vmem:[#allocation2 + $0x60] sm:$0xff] %v2787
    %2806 = vst [vmem:[#allocation2 + $0x68] sm:$0xff] %v2788
    %2807 = vst [vmem:[#allocation2 + $0x70] sm:$0xff] %v2789
    %2808 = vst [vmem:[#allocation2 + $0x78] sm:$0xff] %v2790
    %2809 = vst [vmem:[#allocation2 + $0x80] sm:$0xff] %v2791
    %2810 = vst [vmem:[#allocation2 + $0x88] sm:$0xff] %v2792
    %v2811 = vld [vmem:[#allocation2] sm:$0xff]
    %v2812 = vld [vmem:[#allocation2 + $0x8] sm:$0xff]
    %v2813 = vld [vmem:[#allocation2 + $0x10] sm:$0xff]
    %v2814 = vld [vmem:[#allocation2 + $0x18] sm:$0xff]
    %v2815 = vld [vmem:[#allocation2 + $0x20] sm:$0xff]
    %v2816 = vld [vmem:[#allocation2 + $0x28] sm:$0xff]
    %v2817 = vld [vmem:[#allocation2 + $0x30] sm:$0xff]
    %v2818 = vld [vmem:[#allocation2 + $0x38] sm:$0xff]
    %v2819 = vld [vmem:[#allocation2 + $0x40] sm:$0xff]
    %v2820 = vld [vmem:[#allocation2 + $0x48] sm:$0xff]
    %v2821 = vld [vmem:[#allocation2 + $0x50] sm:$0xff]
    %v2822 = vld [vmem:[#allocation2 + $0x58] sm:$0xff]
    %v2823 = vld [vmem:[#allocation2 + $0x60] sm:$0xff]
    %v2824 = vld [vmem:[#allocation2 + $0x68] sm:$0xff]
    %v2825 = vld [vmem:[#allocation2 + $0x70] sm:$0xff]
    %v2826 = vld [vmem:[#allocation2 + $0x78] sm:$0xff]
    %v2827 = vld [vmem:[#allocation2 + $0x80] sm:$0xff]
    %v2828 = vld [vmem:[#allocation2 + $0x88] sm:$0xff]
    %v2829 = vld [vmem:[%s2] sm:$0x1]
    %v2831 = vlaneseq
    %v2832 = vshrl.u32 %v2831, 7
    %v2833 = vsub.s32 0, %v2832
    %v2834 = vrot.slane %v2829, %v2833
    %v2836 = vadd.f32 %v2811, %v2834
    %v2837 = vadd.f32 %v2812, %v2834
    %v2838 = vadd.f32 %v2813, %v2834
    %v2839 = vadd.f32 %v2814, %v2834
    %v2840 = vadd.f32 %v2815, %v2834
    %v2841 = vadd.f32 %v2816, %v2834
    %v2842 = vadd.f32 %v2817, %v2834
    %v2843 = vadd.f32 %v2818, %v2834
    %v2844 = vadd.f32 %v2819, %v2834
    %v2845 = vadd.f32 %v2820, %v2834
    %v2846 = vadd.f32 %v2821, %v2834
    %v2847 = vadd.f32 %v2822, %v2834
    %v2848 = vadd.f32 %v2823, %v2834
    %v2849 = vadd.f32 %v2824, %v2834
    %v2850 = vadd.f32 %v2825, %v2834
    %v2851 = vadd.f32 %v2826, %v2834
    %v2852 = vadd.f32 %v2827, %v2834
    %v2853 = vadd.f32 %v2828, %v2834
    %v2854 = vmax.f32 %v2836, 0.0
    %v2855 = vmax.f32 %v2837, 0.0
    %v2856 = vmax.f32 %v2838, 0.0
    %v2857 = vmax.f32 %v2839, 0.0
    %v2858 = vmax.f32 %v2840, 0.0
    %v2859 = vmax.f32 %v2841, 0.0
    %v2860 = vmax.f32 %v2842, 0.0
    %v2861 = vmax.f32 %v2843, 0.0
    %v2862 = vmax.f32 %v2844, 0.0
    %v2863 = vmax.f32 %v2845, 0.0
    %v2864 = vmax.f32 %v2846, 0.0
    %v2865 = vmax.f32 %v2847, 0.0
    %v2866 = vmax.f32 %v2848, 0.0
    %v2867 = vmax.f32 %v2849, 0.0
    %v2868 = vmax.f32 %v2850, 0.0
    %v2869 = vmax.f32 %v2851, 0.0
    %v2870 = vmax.f32 %v2852, 0.0
    %v2871 = vmax.f32 %v2853, 0.0
    %v2872 = vpack.c.bf16 %v2855, %v2854
    %v2873 = vpack.c.bf16 %v2857, %v2856
    %v2874 = vpack.c.bf16 %v2859, %v2858
    %v2875 = vpack.c.bf16 %v2861, %v2860
    %v2876 = vpack.c.bf16 %v2863, %v2862
    %v2877 = vpack.c.bf16 %v2865, %v2864
    %v2878 = vpack.c.bf16 %v2867, %v2866
    %v2879 = vpack.c.bf16 %v2869, %v2868
    %v2880 = vpack.c.bf16 %v2871, %v2870
    %v2890 = vunpack.c.l.b16 %v2872
    %v2891 = vunpack.c.h.b16 %v2872
    %v2892 = vunpack.c.l.b16 %v2873
    %v2893 = vunpack.c.h.b16 %v2873
    %v2894 = vunpack.c.l.b16 %v2874
    %v2895 = vunpack.c.h.b16 %v2874
    %v2896 = vunpack.c.l.b16 %v2875
    %v2897 = vunpack.c.h.b16 %v2875
    %v2898 = vunpack.c.l.b16 %v2876
    %v2899 = vunpack.c.h.b16 %v2876
    %v2900 = vunpack.c.l.b16 %v2877
    %v2901 = vunpack.c.h.b16 %v2877
    %v2902 = vunpack.c.l.b16 %v2878
    %v2903 = vunpack.c.h.b16 %v2878
    %v2904 = vunpack.c.l.b16 %v2879
    %v2905 = vunpack.c.h.b16 %v2879
    %v2906 = vunpack.c.l.b16 %v2880
    %v2907 = vunpack.c.h.b16 %v2880
    %v2908 = vpack.c.b16 %v2890, %v2890
    %v2909 = vpack.c.b16 %v2891, %v2891
    %v2910 = vpack.c.b16 %v2892, %v2892
    %v2911 = vpack.c.b16 %v2893, %v2893
    %v2912 = vpack.c.b16 %v2894, %v2894
    %v2913 = vpack.c.b16 %v2895, %v2895
    %v2914 = vpack.c.b16 %v2896, %v2896
    %v2915 = vpack.c.b16 %v2897, %v2897
    %v2916 = vpack.c.b16 %v2898, %v2898
    %v2917 = vpack.c.b16 %v2899, %v2899
    %v2918 = vpack.c.b16 %v2900, %v2900
    %v2919 = vpack.c.b16 %v2901, %v2901
    %v2920 = vpack.c.b16 %v2902, %v2902
    %v2921 = vpack.c.b16 %v2903, %v2903
    %v2922 = vpack.c.b16 %v2904, %v2904
    %v2923 = vpack.c.b16 %v2905, %v2905
    %v2924 = vpack.c.b16 %v2906, %v2906
    %v2925 = vpack.c.b16 %v2907, %v2907
    %2944 = vst [vmem:[#allocation8] sm:$0xf] %v2908
    %2945 = vst [vmem:[#allocation8 + $0x4] sm:$0xf] %v2909
    %2946 = vst [vmem:[#allocation8 + $0x8] sm:$0xf] %v2910
    %2947 = vst [vmem:[#allocation8 + $0xc] sm:$0xf] %v2911
    %2948 = vst [vmem:[#allocation8 + $0x10] sm:$0xf] %v2912
    %2949 = vst [vmem:[#allocation8 + $0x14] sm:$0xf] %v2913
    %2950 = vst [vmem:[#allocation8 + $0x18] sm:$0xf] %v2914
    %2951 = vst [vmem:[#allocation8 + $0x1c] sm:$0xf] %v2915
    %2952 = vst [vmem:[#allocation8 + $0x20] sm:$0xf] %v2916
    %2953 = vst [vmem:[#allocation8 + $0x24] sm:$0xf] %v2917
    %2954 = vst [vmem:[#allocation8 + $0x28] sm:$0xf] %v2918
    %2955 = vst [vmem:[#allocation8 + $0x2c] sm:$0xf] %v2919
    %2956 = vst [vmem:[#allocation8 + $0x30] sm:$0xf] %v2920
    %2957 = vst [vmem:[#allocation8 + $0x34] sm:$0xf] %v2921
    %2958 = vst [vmem:[#allocation8 + $0x38] sm:$0xf] %v2922
    %2959 = vst [vmem:[#allocation8 + $0x3c] sm:$0xf] %v2923
    %2960 = vst [vmem:[#allocation8 + $0x40] sm:$0xf] %v2924
    %2961 = vst [vmem:[#allocation8 + $0x44] sm:$0xf] %v2925
    // Predicated region
    $region22: #{tpu_custom_call.1} parent=1 // pred_check
      _
    $region23: #{tpu_custom_call.1} parent=1 // pred_check_branch
      %2963 = sbr.rel (0) target = $region25
    $region24: #{tpu_custom_call.1} parent=1 // pred_region
      %s2965 = ssub.s32 1152, 1152
      %2966 = vsyncadd [#allocation5], %s2965
      %s2967 = sshll.u32 [#allocation8], 4
      %s2968 = int_to_ptr.vmem [resolvable:$true] %s2967
      %2973 = dma.vmem_to_hbm [thread:$0]  %s2968, 1152, %s3, [#allocation5], 64, 64, 4
    $region25: #{tpu_custom_call.1} parent=1 // pred_fallthru
      _
    // Predicated region
    $region26: #{tpu_custom_call.1} parent=1 // pred_check
      _
    $region27: #{tpu_custom_call.1} parent=1 // pred_check_branch
      %2975 = sbr.rel (0) target = $region29
    $region28: #{tpu_custom_call.1} parent=1 // pred_region
      %2976 = dma.done [#allocation5], 1152
    $region29: #{tpu_custom_call.1} parent=1 // pred_fallthru
      _
    %2977 = vsyncpa [#allocation4], 1
    %2978 = vsyncpa [#allocation7], 1
    %2979 = vsyncpa [#allocation5], 1

</llo_original>
